<compile_context>
chip_gen: v7x
topology: tpu7x:2x2x1
jax: 0.10.0
libtpu: 0.0.40
codegen_flags: <defaults>
</compile_context>

<pallas_src>
import functools
import math

import jax
import jax.numpy as jnp
import numpy as np
from jax.experimental import pallas as pl
from jax.experimental.pallas import tpu as pltpu


def _round_up(x: int, m: int) -> int:
    return ((x + m - 1) // m) * m


# ---------------------------------------------------------------------------
# Pallas kernel: sum over points of min-over-planes point-to-plane distance.
#   params_ref : SMEM (n_plane, 14) f32
#                [0:3]=x basis, [3:6]=y basis, [6:9]=z basis,
#                [9:12]=center·(x,y,z basis), [12:14]=0.5*wh
#   pts_ref    : VMEM (3, rows_per_tile, 128) f32  (xyz planes of a point slab)
#   out_ref    : VMEM (1, 8, 128) f32  per-split lane-wise partial sums
#                (written once, on the last inner grid step)
#   acc_ref    : VMEM (8, 128) f32 scratch (running lane-wise partial sums)
# ---------------------------------------------------------------------------
def _make_plane_loss_kernel(n_plane: int, rows_per_tile: int,
                            steps_per_split: int, n_points: int, n_pad: int):
    tile_p = rows_per_tile * 128
    n_strips = rows_per_tile // 8
    needs_mask = n_pad > n_points
    first_pad_tile = n_points // tile_p      # first global tile touching padding

    def kernel(params_ref, pts_ref, out_ref, acc_ref):
        c = pl.program_id(0)                 # split index (parallel axis)
        i = pl.program_id(1)                 # step within this split (arbitrary)
        g = c * steps_per_split + i          # global tile index

        @pl.when(i == 0)
        def _init():
            acc_ref[...] = jnp.zeros_like(acc_ref)

        # Hoist all per-plane scalar constants out of the strip loop: one SMEM
        # read each per grid step.
        consts = [tuple(params_ref[p, k] for k in range(14))
                  for p in range(n_plane)]

        def run(masked: bool):
            def strip(s, carry):
                r0 = pl.multiple_of(s * 8, 8)
                px = pts_ref[0, pl.ds(r0, 8), :]        # (8, 128)
                py = pts_ref[1, pl.ds(r0, 8), :]
                pz = pts_ref[2, pl.ds(r0, 8), :]

                min_d = None
                for (xb0, xb1, xb2, yb0, yb1, yb2,
                     zb0, zb1, zb2, cx, cy, cz, hw, hh) in consts:
                    dx = px * xb0 + py * xb1 + pz * xb2 - cx
                    dy = px * yb0 + py * yb1 + pz * yb2 - cy
                    dz = px * zb0 + py * zb1 + pz * zb2 - cz
                    dx = jnp.maximum(jnp.abs(dx) - hw, 0.0)
                    dy = jnp.maximum(jnp.abs(dy) - hh, 0.0)
                    d = dx * dx + dy * dy + dz * dz     # (8, 128)
                    min_d = d if min_d is None else jnp.minimum(min_d, d)

                if masked:
                    row = jax.lax.broadcasted_iota(jnp.int32, (8, 128), 0)
                    lane = jax.lax.broadcasted_iota(jnp.int32, (8, 128), 1)
                    gidx = g * tile_p + (r0 + row) * 128 + lane
                    min_d = jnp.where(gidx < n_points, min_d, 0.0)

                return carry + min_d

            total = jax.lax.fori_loop(0, n_strips, strip,
                                      jnp.zeros((8, 128), jnp.float32))
            acc_ref[...] = acc_ref[...] + total

        if needs_mask:
            # Only tiles at/after first_pad_tile can contain padded points.
            @pl.when(g < first_pad_tile)
            def _clean():
                run(False)

            @pl.when(g >= first_pad_tile)
            def _padded():
                run(True)
        else:
            run(False)

        @pl.when(i == pl.num_programs(1) - 1)
        def _finalize():
            out_ref[...] = acc_ref[...][None, :, :]

    return kernel


# ---------------------------------------------------------------------------
# Plain-JAX glue: orthonormal basis from the learned xy vectors (param-sized).
# ---------------------------------------------------------------------------
def _orthonormal_basis_from_xy(xy):
    x = xy[:, :, 0]
    y = xy[:, :, 1]
    z = jnp.cross(x, y)
    y = jnp.cross(z, x)

    def _norm(v):
        n = jnp.linalg.norm(v, axis=-1, keepdims=True)
        return v / jnp.maximum(n, 1e-12)

    return _norm(x), _norm(y), _norm(z)


# ---------------------------------------------------------------------------
# Wrapper implementing PlaneGeometry.forward (init_with_box = False).
# ---------------------------------------------------------------------------
@functools.partial(jax.jit, static_argnames=("tile_rows", "n_split"))
def plane_geometry_forward(points, center, xy, wh, *,
                           tile_rows: int = 256, n_split: int = 2):
    points = points.astype(jnp.float32)
    center = center.astype(jnp.float32)
    xy = xy.astype(jnp.float32)
    wh = wh.astype(jnp.float32)

    n_points = points.shape[0]
    n_plane = center.shape[0]

    # --- hoisted, grid-invariant per-plane constants (packed into one array) ---
    xb, yb, zb = _orthonormal_basis_from_xy(xy)                  # (NP, 3) each
    c_proj = jnp.stack(
        [jnp.sum(center * xb, axis=-1),
         jnp.sum(center * yb, axis=-1),
         jnp.sum(center * zb, axis=-1)], axis=-1)                # (NP, 3)
    half_wh = 0.5 * wh                                           # (NP, 2)
    params = jnp.concatenate([xb, yb, zb, c_proj, half_wh], axis=-1)  # (NP, 14)

    # --- point layout: points dense on lanes, xyz on leading axis -------------
    tile_rows = max(8, (int(tile_rows) // 8) * 8)                # multiple of 8
    rows_needed = -(-n_points // 128)
    rows_per_tile = min(tile_rows, _round_up(max(rows_needed, 1), 8))
    tile_p = rows_per_tile * 128

    tiles_needed = -(-max(n_points, 1) // tile_p)
    split = max(1, min(int(n_split), tiles_needed))              # v7x: 2 TCs
    total_tiles = _round_up(tiles_needed, split)
    steps_per_split = total_tiles // split
    padded_rows = total_tiles * rows_per_tile
    n_pad = padded_rows * 128

    # TODO(synk): if the point cloud is reused across steps, cache this padded
    # (3, rows, 128) relayout outside the training step to save an HBM pass.
    pts_pad = jnp.pad(points, ((0, n_pad - n_points), (0, 0)))   # (n_pad, 3)
    pts_lanes = pts_pad.T.reshape(3, padded_rows, 128)           # (3, rows, 128)

    kernel = _make_plane_loss_kernel(n_plane, rows_per_tile,
                                     steps_per_split, n_points, n_pad)

    partials = pl.pallas_call(
        kernel,
        out_shape=jax.ShapeDtypeStruct((split, 8, 128), jnp.float32),
        grid_spec=pltpu.PrefetchScalarGridSpec(
            num_scalar_prefetch=0,
            grid=(split, steps_per_split),
            in_specs=[
                # packed per-plane constants live in SMEM (scalar reads).
                pl.BlockSpec(memory_space=pltpu.MemorySpace.SMEM),
                # dense point slab, tiled along the row axis.
                pl.BlockSpec((3, rows_per_tile, 128),
                             lambda c, i: (0, c * steps_per_split + i, 0)),
            ],
            out_specs=pl.BlockSpec((1, 8, 128), lambda c, i: (c, 0, 0)),
            scratch_shapes=[pltpu.VMEM((8, 128), jnp.float32)],
        ),
        compiler_params=pltpu.CompilerParams(
            dimension_semantics=("parallel", "arbitrary")),
    )(params, pts_lanes)

    loss_point2plane = jnp.sum(partials) / n_points
    # init_with_box is False after __init__, so area loss covers all planes.
    loss_area = jnp.mean(jnp.abs(wh[:, 0] * wh[:, 1]))
    return {"loss_point2plane": loss_point2plane, "loss_area": loss_area}


# ---------------------------------------------------------------------------
# Pure-JAX reference (mirrors the PyTorch forward) for a correctness check.
# ---------------------------------------------------------------------------
def plane_geometry_forward_ref(points, center, xy, wh):
    xb, yb, zb = _orthonormal_basis_from_xy(xy)
    diff = points[None, :, :] - center[:, None, :]               # (NP, P, 3)
    dx = jnp.einsum("npk,nk->np", diff, xb)
    dy = jnp.einsum("npk,nk->np", diff, yb)
    dz = jnp.einsum("npk,nk->np", diff, zb)
    dx = jnp.maximum(jnp.abs(dx) - wh[:, 0:1] / 2.0, 0.0)
    dy = jnp.maximum(jnp.abs(dy) - wh[:, 1:2] / 2.0, 0.0)
    dist = dx ** 2 + dy ** 2 + dz ** 2
    min_dist = jnp.min(dist, axis=0)
    return {
        "loss_point2plane": jnp.mean(min_dist),
        "loss_area": jnp.mean(jnp.abs(wh[:, 0] * wh[:, 1])),
    }


if __name__ == "__main__":
    key = jax.random.PRNGKey(0)
    k_pts, k_center, k_xy = jax.random.split(key, 3)

    n_plane = 8
    n_points = 500  # deliberately not a multiple of 128

    # Parameters initialized deterministically, following PlaneGeometry.__init__:
    #   center ~ U(0,1), wh = 1, xy = eye(3)[:, :2]  (plus a tiny deterministic
    #   perturbation so the cross-product / normalize path is exercised).
    center = jax.random.uniform(k_center, (n_plane, 3), dtype=jnp.float32)
    wh = jnp.ones((n_plane, 2), dtype=jnp.float32)
    eyes = jnp.tile(jnp.eye(3, dtype=jnp.float32)[None], (n_plane, 1, 1))
    xy = eyes[:, :, :2] + 0.05 * jax.random.normal(k_xy, (n_plane, 3, 2),
                                                   dtype=jnp.float32)

    points = jax.random.normal(k_pts, (n_points, 3), dtype=jnp.float32)

    out = plane_geometry_forward(points, center, xy, wh)
    out = jax.tree_util.tree_map(jax.block_until_ready, out)

    ref = plane_geometry_forward_ref(points, center, xy, wh)
    np.testing.assert_allclose(np.asarray(out["loss_point2plane"]),
                               np.asarray(ref["loss_point2plane"]),
                               rtol=1e-5, atol=1e-5)
    np.testing.assert_allclose(np.asarray(out["loss_area"]),
                               np.asarray(ref["loss_area"]),
                               rtol=1e-6, atol=1e-6)

    print("KERNEL_OK")
</pallas_src>

<mosaic_0001>
module attributes {stable_mosaic.version = 11 : i64} {
  func.func @kernel(%arg0: i32, %arg1: i32, %arg2: memref<8x14xf32, #tpu.memory_space<smem>>, %arg3: memref<3x8x128xf32, #tpu.memory_space<vmem>>, %arg4: memref<1x8x128xf32, #tpu.memory_space<vmem>>, %arg5: memref<8x128xf32, #tpu.memory_space<vmem>>) attributes {dimension_semantics = [#tpu.dimension_semantics<parallel>, #tpu.dimension_semantics<arbitrary>], iteration_bounds = array<i64: 1, 1>, scalar_prefetch = 0 : i64, scratch_operands = 1 : i64, tpu.core_type = #tpu.core_type<tc>, window_params = [{transform_indices = @transform_0, window_bounds = array<i64: 8, 14>}, {transform_indices = @transform_1, window_bounds = array<i64: 3, 8, 128>}, {transform_indices = @transform_2, window_bounds = array<i64: 1, 8, 128>}]} {
    %c1_i32 = arith.constant 1 : i32
    %0 = arith.muli %arg0, %c1_i32 : i32
    %1 = arith.addi %0, %arg1 : i32
    %c0_i32 = arith.constant 0 : i32
    %2 = arith.cmpi eq, %arg1, %c0_i32 : i32
    %3 = arith.extui %2 : i1 to i32
    %c0_i32_0 = arith.constant 0 : i32
    %4 = arith.cmpi ne, %3, %c0_i32_0 : i32
    scf.if %4 {
      %cst = arith.constant 0.000000e+00 : f32
      %126 = vector.broadcast %cst : f32 to vector<8x128xf32>
      %c0_217 = arith.constant 0 : index
      %c0_218 = arith.constant 0 : index
      %127 = vector.load %arg5[%c0_217, %c0_218] : memref<8x128xf32, #tpu.memory_space<vmem>>, vector<8x128xf32>
      tpu.vector_store %arg5[%c0_217, %c0_218], %126 {strides = array<i32>} : memref<8x128xf32, #tpu.memory_space<vmem>>, vector<8x128xf32>,
    } else {
    }
    %c0 = arith.constant 0 : index
    %c0_1 = arith.constant 0 : index
    %5 = memref.load %arg2[%c0, %c0_1] : memref<8x14xf32, #tpu.memory_space<smem>>
    %c0_2 = arith.constant 0 : index
    %c1 = arith.constant 1 : index
    %6 = memref.load %arg2[%c0_2, %c1] : memref<8x14xf32, #tpu.memory_space<smem>>
    %c0_3 = arith.constant 0 : index
    %c2 = arith.constant 2 : index
    %7 = memref.load %arg2[%c0_3, %c2] : memref<8x14xf32, #tpu.memory_space<smem>>
    %c0_4 = arith.constant 0 : index
    %c3 = arith.constant 3 : index
    %8 = memref.load %arg2[%c0_4, %c3] : memref<8x14xf32, #tpu.memory_space<smem>>
    %c0_5 = arith.constant 0 : index
    %c4 = arith.constant 4 : index
    %9 = memref.load %arg2[%c0_5, %c4] : memref<8x14xf32, #tpu.memory_space<smem>>
    %c0_6 = arith.constant 0 : index
    %c5 = arith.constant 5 : index
    %10 = memref.load %arg2[%c0_6, %c5] : memref<8x14xf32, #tpu.memory_space<smem>>
    %c0_7 = arith.constant 0 : index
    %c6 = arith.constant 6 : index
    %11 = memref.load %arg2[%c0_7, %c6] : memref<8x14xf32, #tpu.memory_space<smem>>
    %c0_8 = arith.constant 0 : index
    %c7 = arith.constant 7 : index
    %12 = memref.load %arg2[%c0_8, %c7] : memref<8x14xf32, #tpu.memory_space<smem>>
    %c0_9 = arith.constant 0 : index
    %c8 = arith.constant 8 : index
    %13 = memref.load %arg2[%c0_9, %c8] : memref<8x14xf32, #tpu.memory_space<smem>>
    %c0_10 = arith.constant 0 : index
    %c9 = arith.constant 9 : index
    %14 = memref.load %arg2[%c0_10, %c9] : memref<8x14xf32, #tpu.memory_space<smem>>
    %c0_11 = arith.constant 0 : index
    %c10 = arith.constant 10 : index
    %15 = memref.load %arg2[%c0_11, %c10] : memref<8x14xf32, #tpu.memory_space<smem>>
    %c0_12 = arith.constant 0 : index
    %c11 = arith.constant 11 : index
    %16 = memref.load %arg2[%c0_12, %c11] : memref<8x14xf32, #tpu.memory_space<smem>>
    %c0_13 = arith.constant 0 : index
    %c12 = arith.constant 12 : index
    %17 = memref.load %arg2[%c0_13, %c12] : memref<8x14xf32, #tpu.memory_space<smem>>
    %c0_14 = arith.constant 0 : index
    %c13 = arith.constant 13 : index
    %18 = memref.load %arg2[%c0_14, %c13] : memref<8x14xf32, #tpu.memory_space<smem>>
    %c1_15 = arith.constant 1 : index
    %c0_16 = arith.constant 0 : index
    %19 = memref.load %arg2[%c1_15, %c0_16] : memref<8x14xf32, #tpu.memory_space<smem>>
    %c1_17 = arith.constant 1 : index
    %c1_18 = arith.constant 1 : index
    %20 = memref.load %arg2[%c1_17, %c1_18] : memref<8x14xf32, #tpu.memory_space<smem>>
    %c1_19 = arith.constant 1 : index
    %c2_20 = arith.constant 2 : index
    %21 = memref.load %arg2[%c1_19, %c2_20] : memref<8x14xf32, #tpu.memory_space<smem>>
    %c1_21 = arith.constant 1 : index
    %c3_22 = arith.constant 3 : index
    %22 = memref.load %arg2[%c1_21, %c3_22] : memref<8x14xf32, #tpu.memory_space<smem>>
    %c1_23 = arith.constant 1 : index
    %c4_24 = arith.constant 4 : index
    %23 = memref.load %arg2[%c1_23, %c4_24] : memref<8x14xf32, #tpu.memory_space<smem>>
    %c1_25 = arith.constant 1 : index
    %c5_26 = arith.constant 5 : index
    %24 = memref.load %arg2[%c1_25, %c5_26] : memref<8x14xf32, #tpu.memory_space<smem>>
    %c1_27 = arith.constant 1 : index
    %c6_28 = arith.constant 6 : index
    %25 = memref.load %arg2[%c1_27, %c6_28] : memref<8x14xf32, #tpu.memory_space<smem>>
    %c1_29 = arith.constant 1 : index
    %c7_30 = arith.constant 7 : index
    %26 = memref.load %arg2[%c1_29, %c7_30] : memref<8x14xf32, #tpu.memory_space<smem>>
    %c1_31 = arith.constant 1 : index
    %c8_32 = arith.constant 8 : index
    %27 = memref.load %arg2[%c1_31, %c8_32] : memref<8x14xf32, #tpu.memory_space<smem>>
    %c1_33 = arith.constant 1 : index
    %c9_34 = arith.constant 9 : index
    %28 = memref.load %arg2[%c1_33, %c9_34] : memref<8x14xf32, #tpu.memory_space<smem>>
    %c1_35 = arith.constant 1 : index
    %c10_36 = arith.constant 10 : index
    %29 = memref.load %arg2[%c1_35, %c10_36] : memref<8x14xf32, #tpu.memory_space<smem>>
    %c1_37 = arith.constant 1 : index
    %c11_38 = arith.constant 11 : index
    %30 = memref.load %arg2[%c1_37, %c11_38] : memref<8x14xf32, #tpu.memory_space<smem>>
    %c1_39 = arith.constant 1 : index
    %c12_40 = arith.constant 12 : index
    %31 = memref.load %arg2[%c1_39, %c12_40] : memref<8x14xf32, #tpu.memory_space<smem>>
    %c1_41 = arith.constant 1 : index
    %c13_42 = arith.constant 13 : index
    %32 = memref.load %arg2[%c1_41, %c13_42] : memref<8x14xf32, #tpu.memory_space<smem>>
    %c2_43 = arith.constant 2 : index
    %c0_44 = arith.constant 0 : index
    %33 = memref.load %arg2[%c2_43, %c0_44] : memref<8x14xf32, #tpu.memory_space<smem>>
    %c2_45 = arith.constant 2 : index
    %c1_46 = arith.constant 1 : index
    %34 = memref.load %arg2[%c2_45, %c1_46] : memref<8x14xf32, #tpu.memory_space<smem>>
    %c2_47 = arith.constant 2 : index
    %c2_48 = arith.constant 2 : index
    %35 = memref.load %arg2[%c2_47, %c2_48] : memref<8x14xf32, #tpu.memory_space<smem>>
    %c2_49 = arith.constant 2 : index
    %c3_50 = arith.constant 3 : index
    %36 = memref.load %arg2[%c2_49, %c3_50] : memref<8x14xf32, #tpu.memory_space<smem>>
    %c2_51 = arith.constant 2 : index
    %c4_52 = arith.constant 4 : index
    %37 = memref.load %arg2[%c2_51, %c4_52] : memref<8x14xf32, #tpu.memory_space<smem>>
    %c2_53 = arith.constant 2 : index
    %c5_54 = arith.constant 5 : index
    %38 = memref.load %arg2[%c2_53, %c5_54] : memref<8x14xf32, #tpu.memory_space<smem>>
    %c2_55 = arith.constant 2 : index
    %c6_56 = arith.constant 6 : index
    %39 = memref.load %arg2[%c2_55, %c6_56] : memref<8x14xf32, #tpu.memory_space<smem>>
    %c2_57 = arith.constant 2 : index
    %c7_58 = arith.constant 7 : index
    %40 = memref.load %arg2[%c2_57, %c7_58] : memref<8x14xf32, #tpu.memory_space<smem>>
    %c2_59 = arith.constant 2 : index
    %c8_60 = arith.constant 8 : index
    %41 = memref.load %arg2[%c2_59, %c8_60] : memref<8x14xf32, #tpu.memory_space<smem>>
    %c2_61 = arith.constant 2 : index
    %c9_62 = arith.constant 9 : index
    %42 = memref.load %arg2[%c2_61, %c9_62] : memref<8x14xf32, #tpu.memory_space<smem>>
    %c2_63 = arith.constant 2 : index
    %c10_64 = arith.constant 10 : index
    %43 = memref.load %arg2[%c2_63, %c10_64] : memref<8x14xf32, #tpu.memory_space<smem>>
    %c2_65 = arith.constant 2 : index
    %c11_66 = arith.constant 11 : index
    %44 = memref.load %arg2[%c2_65, %c11_66] : memref<8x14xf32, #tpu.memory_space<smem>>
    %c2_67 = arith.constant 2 : index
    %c12_68 = arith.constant 12 : index
    %45 = memref.load %arg2[%c2_67, %c12_68] : memref<8x14xf32, #tpu.memory_space<smem>>
    %c2_69 = arith.constant 2 : index
    %c13_70 = arith.constant 13 : index
    %46 = memref.load %arg2[%c2_69, %c13_70] : memref<8x14xf32, #tpu.memory_space<smem>>
    %c3_71 = arith.constant 3 : index
    %c0_72 = arith.constant 0 : index
    %47 = memref.load %arg2[%c3_71, %c0_72] : memref<8x14xf32, #tpu.memory_space<smem>>
    %c3_73 = arith.constant 3 : index
    %c1_74 = arith.constant 1 : index
    %48 = memref.load %arg2[%c3_73, %c1_74] : memref<8x14xf32, #tpu.memory_space<smem>>
    %c3_75 = arith.constant 3 : index
    %c2_76 = arith.constant 2 : index
    %49 = memref.load %arg2[%c3_75, %c2_76] : memref<8x14xf32, #tpu.memory_space<smem>>
    %c3_77 = arith.constant 3 : index
    %c3_78 = arith.constant 3 : index
    %50 = memref.load %arg2[%c3_77, %c3_78] : memref<8x14xf32, #tpu.memory_space<smem>>
    %c3_79 = arith.constant 3 : index
    %c4_80 = arith.constant 4 : index
    %51 = memref.load %arg2[%c3_79, %c4_80] : memref<8x14xf32, #tpu.memory_space<smem>>
    %c3_81 = arith.constant 3 : index
    %c5_82 = arith.constant 5 : index
    %52 = memref.load %arg2[%c3_81, %c5_82] : memref<8x14xf32, #tpu.memory_space<smem>>
    %c3_83 = arith.constant 3 : index
    %c6_84 = arith.constant 6 : index
    %53 = memref.load %arg2[%c3_83, %c6_84] : memref<8x14xf32, #tpu.memory_space<smem>>
    %c3_85 = arith.constant 3 : index
    %c7_86 = arith.constant 7 : index
    %54 = memref.load %arg2[%c3_85, %c7_86] : memref<8x14xf32, #tpu.memory_space<smem>>
    %c3_87 = arith.constant 3 : index
    %c8_88 = arith.constant 8 : index
    %55 = memref.load %arg2[%c3_87, %c8_88] : memref<8x14xf32, #tpu.memory_space<smem>>
    %c3_89 = arith.constant 3 : index
    %c9_90 = arith.constant 9 : index
    %56 = memref.load %arg2[%c3_89, %c9_90] : memref<8x14xf32, #tpu.memory_space<smem>>
    %c3_91 = arith.constant 3 : index
    %c10_92 = arith.constant 10 : index
    %57 = memref.load %arg2[%c3_91, %c10_92] : memref<8x14xf32, #tpu.memory_space<smem>>
    %c3_93 = arith.constant 3 : index
    %c11_94 = arith.constant 11 : index
    %58 = memref.load %arg2[%c3_93, %c11_94] : memref<8x14xf32, #tpu.memory_space<smem>>
    %c3_95 = arith.constant 3 : index
    %c12_96 = arith.constant 12 : index
    %59 = memref.load %arg2[%c3_95, %c12_96] : memref<8x14xf32, #tpu.memory_space<smem>>
    %c3_97 = arith.constant 3 : index
    %c13_98 = arith.constant 13 : index
    %60 = memref.load %arg2[%c3_97, %c13_98] : memref<8x14xf32, #tpu.memory_space<smem>>
    %c4_99 = arith.constant 4 : index
    %c0_100 = arith.constant 0 : index
    %61 = memref.load %arg2[%c4_99, %c0_100] : memref<8x14xf32, #tpu.memory_space<smem>>
    %c4_101 = arith.constant 4 : index
    %c1_102 = arith.constant 1 : index
    %62 = memref.load %arg2[%c4_101, %c1_102] : memref<8x14xf32, #tpu.memory_space<smem>>
    %c4_103 = arith.constant 4 : index
    %c2_104 = arith.constant 2 : index
    %63 = memref.load %arg2[%c4_103, %c2_104] : memref<8x14xf32, #tpu.memory_space<smem>>
    %c4_105 = arith.constant 4 : index
    %c3_106 = arith.constant 3 : index
    %64 = memref.load %arg2[%c4_105, %c3_106] : memref<8x14xf32, #tpu.memory_space<smem>>
    %c4_107 = arith.constant 4 : index
    %c4_108 = arith.constant 4 : index
    %65 = memref.load %arg2[%c4_107, %c4_108] : memref<8x14xf32, #tpu.memory_space<smem>>
    %c4_109 = arith.constant 4 : index
    %c5_110 = arith.constant 5 : index
    %66 = memref.load %arg2[%c4_109, %c5_110] : memref<8x14xf32, #tpu.memory_space<smem>>
    %c4_111 = arith.constant 4 : index
    %c6_112 = arith.constant 6 : index
    %67 = memref.load %arg2[%c4_111, %c6_112] : memref<8x14xf32, #tpu.memory_space<smem>>
    %c4_113 = arith.constant 4 : index
    %c7_114 = arith.constant 7 : index
    %68 = memref.load %arg2[%c4_113, %c7_114] : memref<8x14xf32, #tpu.memory_space<smem>>
    %c4_115 = arith.constant 4 : index
    %c8_116 = arith.constant 8 : index
    %69 = memref.load %arg2[%c4_115, %c8_116] : memref<8x14xf32, #tpu.memory_space<smem>>
    %c4_117 = arith.constant 4 : index
    %c9_118 = arith.constant 9 : index
    %70 = memref.load %arg2[%c4_117, %c9_118] : memref<8x14xf32, #tpu.memory_space<smem>>
    %c4_119 = arith.constant 4 : index
    %c10_120 = arith.constant 10 : index
    %71 = memref.load %arg2[%c4_119, %c10_120] : memref<8x14xf32, #tpu.memory_space<smem>>
    %c4_121 = arith.constant 4 : index
    %c11_122 = arith.constant 11 : index
    %72 = memref.load %arg2[%c4_121, %c11_122] : memref<8x14xf32, #tpu.memory_space<smem>>
    %c4_123 = arith.constant 4 : index
    %c12_124 = arith.constant 12 : index
    %73 = memref.load %arg2[%c4_123, %c12_124] : memref<8x14xf32, #tpu.memory_space<smem>>
    %c4_125 = arith.constant 4 : index
    %c13_126 = arith.constant 13 : index
    %74 = memref.load %arg2[%c4_125, %c13_126] : memref<8x14xf32, #tpu.memory_space<smem>>
    %c5_127 = arith.constant 5 : index
    %c0_128 = arith.constant 0 : index
    %75 = memref.load %arg2[%c5_127, %c0_128] : memref<8x14xf32, #tpu.memory_space<smem>>
    %c5_129 = arith.constant 5 : index
    %c1_130 = arith.constant 1 : index
    %76 = memref.load %arg2[%c5_129, %c1_130] : memref<8x14xf32, #tpu.memory_space<smem>>
    %c5_131 = arith.constant 5 : index
    %c2_132 = arith.constant 2 : index
    %77 = memref.load %arg2[%c5_131, %c2_132] : memref<8x14xf32, #tpu.memory_space<smem>>
    %c5_133 = arith.constant 5 : index
    %c3_134 = arith.constant 3 : index
    %78 = memref.load %arg2[%c5_133, %c3_134] : memref<8x14xf32, #tpu.memory_space<smem>>
    %c5_135 = arith.constant 5 : index
    %c4_136 = arith.constant 4 : index
    %79 = memref.load %arg2[%c5_135, %c4_136] : memref<8x14xf32, #tpu.memory_space<smem>>
    %c5_137 = arith.constant 5 : index
    %c5_138 = arith.constant 5 : index
    %80 = memref.load %arg2[%c5_137, %c5_138] : memref<8x14xf32, #tpu.memory_space<smem>>
    %c5_139 = arith.constant 5 : index
    %c6_140 = arith.constant 6 : index
    %81 = memref.load %arg2[%c5_139, %c6_140] : memref<8x14xf32, #tpu.memory_space<smem>>
    %c5_141 = arith.constant 5 : index
    %c7_142 = arith.constant 7 : index
    %82 = memref.load %arg2[%c5_141, %c7_142] : memref<8x14xf32, #tpu.memory_space<smem>>
    %c5_143 = arith.constant 5 : index
    %c8_144 = arith.constant 8 : index
    %83 = memref.load %arg2[%c5_143, %c8_144] : memref<8x14xf32, #tpu.memory_space<smem>>
    %c5_145 = arith.constant 5 : index
    %c9_146 = arith.constant 9 : index
    %84 = memref.load %arg2[%c5_145, %c9_146] : memref<8x14xf32, #tpu.memory_space<smem>>
    %c5_147 = arith.constant 5 : index
    %c10_148 = arith.constant 10 : index
    %85 = memref.load %arg2[%c5_147, %c10_148] : memref<8x14xf32, #tpu.memory_space<smem>>
    %c5_149 = arith.constant 5 : index
    %c11_150 = arith.constant 11 : index
    %86 = memref.load %arg2[%c5_149, %c11_150] : memref<8x14xf32, #tpu.memory_space<smem>>
    %c5_151 = arith.constant 5 : index
    %c12_152 = arith.constant 12 : index
    %87 = memref.load %arg2[%c5_151, %c12_152] : memref<8x14xf32, #tpu.memory_space<smem>>
    %c5_153 = arith.constant 5 : index
    %c13_154 = arith.constant 13 : index
    %88 = memref.load %arg2[%c5_153, %c13_154] : memref<8x14xf32, #tpu.memory_space<smem>>
    %c6_155 = arith.constant 6 : index
    %c0_156 = arith.constant 0 : index
    %89 = memref.load %arg2[%c6_155, %c0_156] : memref<8x14xf32, #tpu.memory_space<smem>>
    %c6_157 = arith.constant 6 : index
    %c1_158 = arith.constant 1 : index
    %90 = memref.load %arg2[%c6_157, %c1_158] : memref<8x14xf32, #tpu.memory_space<smem>>
    %c6_159 = arith.constant 6 : index
    %c2_160 = arith.constant 2 : index
    %91 = memref.load %arg2[%c6_159, %c2_160] : memref<8x14xf32, #tpu.memory_space<smem>>
    %c6_161 = arith.constant 6 : index
    %c3_162 = arith.constant 3 : index
    %92 = memref.load %arg2[%c6_161, %c3_162] : memref<8x14xf32, #tpu.memory_space<smem>>
    %c6_163 = arith.constant 6 : index
    %c4_164 = arith.constant 4 : index
    %93 = memref.load %arg2[%c6_163, %c4_164] : memref<8x14xf32, #tpu.memory_space<smem>>
    %c6_165 = arith.constant 6 : index
    %c5_166 = arith.constant 5 : index
    %94 = memref.load %arg2[%c6_165, %c5_166] : memref<8x14xf32, #tpu.memory_space<smem>>
    %c6_167 = arith.constant 6 : index
    %c6_168 = arith.constant 6 : index
    %95 = memref.load %arg2[%c6_167, %c6_168] : memref<8x14xf32, #tpu.memory_space<smem>>
    %c6_169 = arith.constant 6 : index
    %c7_170 = arith.constant 7 : index
    %96 = memref.load %arg2[%c6_169, %c7_170] : memref<8x14xf32, #tpu.memory_space<smem>>
    %c6_171 = arith.constant 6 : index
    %c8_172 = arith.constant 8 : index
    %97 = memref.load %arg2[%c6_171, %c8_172] : memref<8x14xf32, #tpu.memory_space<smem>>
    %c6_173 = arith.constant 6 : index
    %c9_174 = arith.constant 9 : index
    %98 = memref.load %arg2[%c6_173, %c9_174] : memref<8x14xf32, #tpu.memory_space<smem>>
    %c6_175 = arith.constant 6 : index
    %c10_176 = arith.constant 10 : index
    %99 = memref.load %arg2[%c6_175, %c10_176] : memref<8x14xf32, #tpu.memory_space<smem>>
    %c6_177 = arith.constant 6 : index
    %c11_178 = arith.constant 11 : index
    %100 = memref.load %arg2[%c6_177, %c11_178] : memref<8x14xf32, #tpu.memory_space<smem>>
    %c6_179 = arith.constant 6 : index
    %c12_180 = arith.constant 12 : index
    %101 = memref.load %arg2[%c6_179, %c12_180] : memref<8x14xf32, #tpu.memory_space<smem>>
    %c6_181 = arith.constant 6 : index
    %c13_182 = arith.constant 13 : index
    %102 = memref.load %arg2[%c6_181, %c13_182] : memref<8x14xf32, #tpu.memory_space<smem>>
    %c7_183 = arith.constant 7 : index
    %c0_184 = arith.constant 0 : index
    %103 = memref.load %arg2[%c7_183, %c0_184] : memref<8x14xf32, #tpu.memory_space<smem>>
    %c7_185 = arith.constant 7 : index
    %c1_186 = arith.constant 1 : index
    %104 = memref.load %arg2[%c7_185, %c1_186] : memref<8x14xf32, #tpu.memory_space<smem>>
    %c7_187 = arith.constant 7 : index
    %c2_188 = arith.constant 2 : index
    %105 = memref.load %arg2[%c7_187, %c2_188] : memref<8x14xf32, #tpu.memory_space<smem>>
    %c7_189 = arith.constant 7 : index
    %c3_190 = arith.constant 3 : index
    %106 = memref.load %arg2[%c7_189, %c3_190] : memref<8x14xf32, #tpu.memory_space<smem>>
    %c7_191 = arith.constant 7 : index
    %c4_192 = arith.constant 4 : index
    %107 = memref.load %arg2[%c7_191, %c4_192] : memref<8x14xf32, #tpu.memory_space<smem>>
    %c7_193 = arith.constant 7 : index
    %c5_194 = arith.constant 5 : index
    %108 = memref.load %arg2[%c7_193, %c5_194] : memref<8x14xf32, #tpu.memory_space<smem>>
    %c7_195 = arith.constant 7 : index
    %c6_196 = arith.constant 6 : index
    %109 = memref.load %arg2[%c7_195, %c6_196] : memref<8x14xf32, #tpu.memory_space<smem>>
    %c7_197 = arith.constant 7 : index
    %c7_198 = arith.constant 7 : index
    %110 = memref.load %arg2[%c7_197, %c7_198] : memref<8x14xf32, #tpu.memory_space<smem>>
    %c7_199 = arith.constant 7 : index
    %c8_200 = arith.constant 8 : index
    %111 = memref.load %arg2[%c7_199, %c8_200] : memref<8x14xf32, #tpu.memory_space<smem>>
    %c7_201 = arith.constant 7 : index
    %c9_202 = arith.constant 9 : index
    %112 = memref.load %arg2[%c7_201, %c9_202] : memref<8x14xf32, #tpu.memory_space<smem>>
    %c7_203 = arith.constant 7 : index
    %c10_204 = arith.constant 10 : index
    %113 = memref.load %arg2[%c7_203, %c10_204] : memref<8x14xf32, #tpu.memory_space<smem>>
    %c7_205 = arith.constant 7 : index
    %c11_206 = arith.constant 11 : index
    %114 = memref.load %arg2[%c7_205, %c11_206] : memref<8x14xf32, #tpu.memory_space<smem>>
    %c7_207 = arith.constant 7 : index
    %c12_208 = arith.constant 12 : index
    %115 = memref.load %arg2[%c7_207, %c12_208] : memref<8x14xf32, #tpu.memory_space<smem>>
    %c7_209 = arith.constant 7 : index
    %c13_210 = arith.constant 13 : index
    %116 = memref.load %arg2[%c7_209, %c13_210] : memref<8x14xf32, #tpu.memory_space<smem>>
    %c0_i32_211 = arith.constant 0 : i32
    %117 = arith.cmpi slt, %1, %c0_i32_211 : i32
    %118 = arith.extui %117 : i1 to i32
    %c0_i32_212 = arith.constant 0 : i32
    %119 = arith.cmpi ne, %118, %c0_i32_212 : i32
    scf.if %119 {
      %cst = arith.constant 0.000000e+00 : f32
      %126 = vector.broadcast %cst : f32 to vector<8x128xf32>
      %c0_i32_217 = arith.constant 0 : i32
      %c8_i32 = arith.constant 8 : i32
      %127 = arith.muli %c0_i32_217, %c8_i32 : i32
      %128 = tpu.assume_multiple %127, 8 : i32
      %c0_218 = arith.constant 0 : index
      %129 = arith.index_cast %128 : i32 to index
      %c0_219 = arith.constant 0 : index
      %130 = vector.load %arg3[%c0_218, %129, %c0_219] : memref<3x8x128xf32, #tpu.memory_space<vmem>>, vector<1x8x128xf32>
      %131 = vector.shape_cast %130 : vector<1x8x128xf32> to vector<8x128xf32>
      %c1_220 = arith.constant 1 : index
      %132 = arith.index_cast %128 : i32 to index
      %c0_221 = arith.constant 0 : index
      %133 = vector.load %arg3[%c1_220, %132, %c0_221] : memref<3x8x128xf32, #tpu.memory_space<vmem>>, vector<1x8x128xf32>
      %134 = vector.shape_cast %133 : vector<1x8x128xf32> to vector<8x128xf32>
      %c2_222 = arith.constant 2 : index
      %135 = arith.index_cast %128 : i32 to index
      %c0_223 = arith.constant 0 : index
      %136 = vector.load %arg3[%c2_222, %135, %c0_223] : memref<3x8x128xf32, #tpu.memory_space<vmem>>, vector<1x8x128xf32>
      %137 = vector.shape_cast %136 : vector<1x8x128xf32> to vector<8x128xf32>
      %138 = vector.broadcast %5 : f32 to vector<8x128xf32>
      %139 = arith.mulf %131, %138 : vector<8x128xf32>
      %140 = vector.broadcast %6 : f32 to vector<8x128xf32>
      %141 = arith.mulf %134, %140 : vector<8x128xf32>
      %142 = arith.addf %139, %141 : vector<8x128xf32>
      %143 = vector.broadcast %7 : f32 to vector<8x128xf32>
      %144 = arith.mulf %137, %143 : vector<8x128xf32>
      %145 = arith.addf %142, %144 : vector<8x128xf32>
      %146 = vector.broadcast %14 : f32 to vector<8x128xf32>
      %147 = arith.subf %145, %146 : vector<8x128xf32>
      %148 = vector.broadcast %8 : f32 to vector<8x128xf32>
      %149 = arith.mulf %131, %148 : vector<8x128xf32>
      %150 = vector.broadcast %9 : f32 to vector<8x128xf32>
      %151 = arith.mulf %134, %150 : vector<8x128xf32>
      %152 = arith.addf %149, %151 : vector<8x128xf32>
      %153 = vector.broadcast %10 : f32 to vector<8x128xf32>
      %154 = arith.mulf %137, %153 : vector<8x128xf32>
      %155 = arith.addf %152, %154 : vector<8x128xf32>
      %156 = vector.broadcast %15 : f32 to vector<8x128xf32>
      %157 = arith.subf %155, %156 : vector<8x128xf32>
      %158 = vector.broadcast %11 : f32 to vector<8x128xf32>
      %159 = arith.mulf %131, %158 : vector<8x128xf32>
      %160 = vector.broadcast %12 : f32 to vector<8x128xf32>
      %161 = arith.mulf %134, %160 : vector<8x128xf32>
      %162 = arith.addf %159, %161 : vector<8x128xf32>
      %163 = vector.broadcast %13 : f32 to vector<8x128xf32>
      %164 = arith.mulf %137, %163 : vector<8x128xf32>
      %165 = arith.addf %162, %164 : vector<8x128xf32>
      %166 = vector.broadcast %16 : f32 to vector<8x128xf32>
      %167 = arith.subf %165, %166 : vector<8x128xf32>
      %168 = math.absf %147 : vector<8x128xf32>
      %169 = vector.broadcast %17 : f32 to vector<8x128xf32>
      %170 = arith.subf %168, %169 : vector<8x128xf32>
      %cst_224 = arith.constant 0.000000e+00 : f32
      %171 = vector.broadcast %cst_224 : f32 to vector<8x128xf32>
      %172 = arith.maximumf %170, %171 : vector<8x128xf32>
      %173 = math.absf %157 : vector<8x128xf32>
      %174 = vector.broadcast %18 : f32 to vector<8x128xf32>
      %175 = arith.subf %173, %174 : vector<8x128xf32>
      %cst_225 = arith.constant 0.000000e+00 : f32
      %176 = vector.broadcast %cst_225 : f32 to vector<8x128xf32>
      %177 = arith.maximumf %175, %176 : vector<8x128xf32>
      %178 = arith.mulf %172, %172 : vector<8x128xf32>
      %179 = arith.mulf %177, %177 : vector<8x128xf32>
      %180 = arith.addf %178, %179 : vector<8x128xf32>
      %181 = arith.mulf %167, %167 : vector<8x128xf32>
      %182 = arith.addf %180, %181 : vector<8x128xf32>
      %183 = vector.broadcast %19 : f32 to vector<8x128xf32>
      %184 = arith.mulf %131, %183 : vector<8x128xf32>
      %185 = vector.broadcast %20 : f32 to vector<8x128xf32>
      %186 = arith.mulf %134, %185 : vector<8x128xf32>
      %187 = arith.addf %184, %186 : vector<8x128xf32>
      %188 = vector.broadcast %21 : f32 to vector<8x128xf32>
      %189 = arith.mulf %137, %188 : vector<8x128xf32>
      %190 = arith.addf %187, %189 : vector<8x128xf32>
      %191 = vector.broadcast %28 : f32 to vector<8x128xf32>
      %192 = arith.subf %190, %191 : vector<8x128xf32>
      %193 = vector.broadcast %22 : f32 to vector<8x128xf32>
      %194 = arith.mulf %131, %193 : vector<8x128xf32>
      %195 = vector.broadcast %23 : f32 to vector<8x128xf32>
      %196 = arith.mulf %134, %195 : vector<8x128xf32>
      %197 = arith.addf %194, %196 : vector<8x128xf32>
      %198 = vector.broadcast %24 : f32 to vector<8x128xf32>
      %199 = arith.mulf %137, %198 : vector<8x128xf32>
      %200 = arith.addf %197, %199 : vector<8x128xf32>
      %201 = vector.broadcast %29 : f32 to vector<8x128xf32>
      %202 = arith.subf %200, %201 : vector<8x128xf32>
      %203 = vector.broadcast %25 : f32 to vector<8x128xf32>
      %204 = arith.mulf %131, %203 : vector<8x128xf32>
      %205 = vector.broadcast %26 : f32 to vector<8x128xf32>
      %206 = arith.mulf %134, %205 : vector<8x128xf32>
      %207 = arith.addf %204, %206 : vector<8x128xf32>
      %208 = vector.broadcast %27 : f32 to vector<8x128xf32>
      %209 = arith.mulf %137, %208 : vector<8x128xf32>
      %210 = arith.addf %207, %209 : vector<8x128xf32>
      %211 = vector.broadcast %30 : f32 to vector<8x128xf32>
      %212 = arith.subf %210, %211 : vector<8x128xf32>
      %213 = math.absf %192 : vector<8x128xf32>
      %214 = vector.broadcast %31 : f32 to vector<8x128xf32>
      %215 = arith.subf %213, %214 : vector<8x128xf32>
      %cst_226 = arith.constant 0.000000e+00 : f32
      %216 = vector.broadcast %cst_226 : f32 to vector<8x128xf32>
      %217 = arith.maximumf %215, %216 : vector<8x128xf32>
      %218 = math.absf %202 : vector<8x128xf32>
      %219 = vector.broadcast %32 : f32 to vector<8x128xf32>
      %220 = arith.subf %218, %219 : vector<8x128xf32>
      %cst_227 = arith.constant 0.000000e+00 : f32
      %221 = vector.broadcast %cst_227 : f32 to vector<8x128xf32>
      %222 = arith.maximumf %220, %221 : vector<8x128xf32>
      %223 = arith.mulf %217, %217 : vector<8x128xf32>
      %224 = arith.mulf %222, %222 : vector<8x128xf32>
      %225 = arith.addf %223, %224 : vector<8x128xf32>
      %226 = arith.mulf %212, %212 : vector<8x128xf32>
      %227 = arith.addf %225, %226 : vector<8x128xf32>
      %228 = arith.minimumf %182, %227 : vector<8x128xf32>
      %229 = vector.broadcast %33 : f32 to vector<8x128xf32>
      %230 = arith.mulf %131, %229 : vector<8x128xf32>
      %231 = vector.broadcast %34 : f32 to vector<8x128xf32>
      %232 = arith.mulf %134, %231 : vector<8x128xf32>
      %233 = arith.addf %230, %232 : vector<8x128xf32>
      %234 = vector.broadcast %35 : f32 to vector<8x128xf32>
      %235 = arith.mulf %137, %234 : vector<8x128xf32>
      %236 = arith.addf %233, %235 : vector<8x128xf32>
      %237 = vector.broadcast %42 : f32 to vector<8x128xf32>
      %238 = arith.subf %236, %237 : vector<8x128xf32>
      %239 = vector.broadcast %36 : f32 to vector<8x128xf32>
      %240 = arith.mulf %131, %239 : vector<8x128xf32>
      %241 = vector.broadcast %37 : f32 to vector<8x128xf32>
      %242 = arith.mulf %134, %241 : vector<8x128xf32>
      %243 = arith.addf %240, %242 : vector<8x128xf32>
      %244 = vector.broadcast %38 : f32 to vector<8x128xf32>
      %245 = arith.mulf %137, %244 : vector<8x128xf32>
      %246 = arith.addf %243, %245 : vector<8x128xf32>
      %247 = vector.broadcast %43 : f32 to vector<8x128xf32>
      %248 = arith.subf %246, %247 : vector<8x128xf32>
      %249 = vector.broadcast %39 : f32 to vector<8x128xf32>
      %250 = arith.mulf %131, %249 : vector<8x128xf32>
      %251 = vector.broadcast %40 : f32 to vector<8x128xf32>
      %252 = arith.mulf %134, %251 : vector<8x128xf32>
      %253 = arith.addf %250, %252 : vector<8x128xf32>
      %254 = vector.broadcast %41 : f32 to vector<8x128xf32>
      %255 = arith.mulf %137, %254 : vector<8x128xf32>
      %256 = arith.addf %253, %255 : vector<8x128xf32>
      %257 = vector.broadcast %44 : f32 to vector<8x128xf32>
      %258 = arith.subf %256, %257 : vector<8x128xf32>
      %259 = math.absf %238 : vector<8x128xf32>
      %260 = vector.broadcast %45 : f32 to vector<8x128xf32>
      %261 = arith.subf %259, %260 : vector<8x128xf32>
      %cst_228 = arith.constant 0.000000e+00 : f32
      %262 = vector.broadcast %cst_228 : f32 to vector<8x128xf32>
      %263 = arith.maximumf %261, %262 : vector<8x128xf32>
      %264 = math.absf %248 : vector<8x128xf32>
      %265 = vector.broadcast %46 : f32 to vector<8x128xf32>
      %266 = arith.subf %264, %265 : vector<8x128xf32>
      %cst_229 = arith.constant 0.000000e+00 : f32
      %267 = vector.broadcast %cst_229 : f32 to vector<8x128xf32>
      %268 = arith.maximumf %266, %267 : vector<8x128xf32>
      %269 = arith.mulf %263, %263 : vector<8x128xf32>
      %270 = arith.mulf %268, %268 : vector<8x128xf32>
      %271 = arith.addf %269, %270 : vector<8x128xf32>
      %272 = arith.mulf %258, %258 : vector<8x128xf32>
      %273 = arith.addf %271, %272 : vector<8x128xf32>
      %274 = arith.minimumf %228, %273 : vector<8x128xf32>
      %275 = vector.broadcast %47 : f32 to vector<8x128xf32>
      %276 = arith.mulf %131, %275 : vector<8x128xf32>
      %277 = vector.broadcast %48 : f32 to vector<8x128xf32>
      %278 = arith.mulf %134, %277 : vector<8x128xf32>
      %279 = arith.addf %276, %278 : vector<8x128xf32>
      %280 = vector.broadcast %49 : f32 to vector<8x128xf32>
      %281 = arith.mulf %137, %280 : vector<8x128xf32>
      %282 = arith.addf %279, %281 : vector<8x128xf32>
      %283 = vector.broadcast %56 : f32 to vector<8x128xf32>
      %284 = arith.subf %282, %283 : vector<8x128xf32>
      %285 = vector.broadcast %50 : f32 to vector<8x128xf32>
      %286 = arith.mulf %131, %285 : vector<8x128xf32>
      %287 = vector.broadcast %51 : f32 to vector<8x128xf32>
      %288 = arith.mulf %134, %287 : vector<8x128xf32>
      %289 = arith.addf %286, %288 : vector<8x128xf32>
      %290 = vector.broadcast %52 : f32 to vector<8x128xf32>
      %291 = arith.mulf %137, %290 : vector<8x128xf32>
      %292 = arith.addf %289, %291 : vector<8x128xf32>
      %293 = vector.broadcast %57 : f32 to vector<8x128xf32>
      %294 = arith.subf %292, %293 : vector<8x128xf32>
      %295 = vector.broadcast %53 : f32 to vector<8x128xf32>
      %296 = arith.mulf %131, %295 : vector<8x128xf32>
      %297 = vector.broadcast %54 : f32 to vector<8x128xf32>
      %298 = arith.mulf %134, %297 : vector<8x128xf32>
      %299 = arith.addf %296, %298 : vector<8x128xf32>
      %300 = vector.broadcast %55 : f32 to vector<8x128xf32>
      %301 = arith.mulf %137, %300 : vector<8x128xf32>
      %302 = arith.addf %299, %301 : vector<8x128xf32>
      %303 = vector.broadcast %58 : f32 to vector<8x128xf32>
      %304 = arith.subf %302, %303 : vector<8x128xf32>
      %305 = math.absf %284 : vector<8x128xf32>
      %306 = vector.broadcast %59 : f32 to vector<8x128xf32>
      %307 = arith.subf %305, %306 : vector<8x128xf32>
      %cst_230 = arith.constant 0.000000e+00 : f32
      %308 = vector.broadcast %cst_230 : f32 to vector<8x128xf32>
      %309 = arith.maximumf %307, %308 : vector<8x128xf32>
      %310 = math.absf %294 : vector<8x128xf32>
      %311 = vector.broadcast %60 : f32 to vector<8x128xf32>
      %312 = arith.subf %310, %311 : vector<8x128xf32>
      %cst_231 = arith.constant 0.000000e+00 : f32
      %313 = vector.broadcast %cst_231 : f32 to vector<8x128xf32>
      %314 = arith.maximumf %312, %313 : vector<8x128xf32>
      %315 = arith.mulf %309, %309 : vector<8x128xf32>
      %316 = arith.mulf %314, %314 : vector<8x128xf32>
      %317 = arith.addf %315, %316 : vector<8x128xf32>
      %318 = arith.mulf %304, %304 : vector<8x128xf32>
      %319 = arith.addf %317, %318 : vector<8x128xf32>
      %320 = arith.minimumf %274, %319 : vector<8x128xf32>
      %321 = vector.broadcast %61 : f32 to vector<8x128xf32>
      %322 = arith.mulf %131, %321 : vector<8x128xf32>
      %323 = vector.broadcast %62 : f32 to vector<8x128xf32>
      %324 = arith.mulf %134, %323 : vector<8x128xf32>
      %325 = arith.addf %322, %324 : vector<8x128xf32>
      %326 = vector.broadcast %63 : f32 to vector<8x128xf32>
      %327 = arith.mulf %137, %326 : vector<8x128xf32>
      %328 = arith.addf %325, %327 : vector<8x128xf32>
      %329 = vector.broadcast %70 : f32 to vector<8x128xf32>
      %330 = arith.subf %328, %329 : vector<8x128xf32>
      %331 = vector.broadcast %64 : f32 to vector<8x128xf32>
      %332 = arith.mulf %131, %331 : vector<8x128xf32>
      %333 = vector.broadcast %65 : f32 to vector<8x128xf32>
      %334 = arith.mulf %134, %333 : vector<8x128xf32>
      %335 = arith.addf %332, %334 : vector<8x128xf32>
      %336 = vector.broadcast %66 : f32 to vector<8x128xf32>
      %337 = arith.mulf %137, %336 : vector<8x128xf32>
      %338 = arith.addf %335, %337 : vector<8x128xf32>
      %339 = vector.broadcast %71 : f32 to vector<8x128xf32>
      %340 = arith.subf %338, %339 : vector<8x128xf32>
      %341 = vector.broadcast %67 : f32 to vector<8x128xf32>
      %342 = arith.mulf %131, %341 : vector<8x128xf32>
      %343 = vector.broadcast %68 : f32 to vector<8x128xf32>
      %344 = arith.mulf %134, %343 : vector<8x128xf32>
      %345 = arith.addf %342, %344 : vector<8x128xf32>
      %346 = vector.broadcast %69 : f32 to vector<8x128xf32>
      %347 = arith.mulf %137, %346 : vector<8x128xf32>
      %348 = arith.addf %345, %347 : vector<8x128xf32>
      %349 = vector.broadcast %72 : f32 to vector<8x128xf32>
      %350 = arith.subf %348, %349 : vector<8x128xf32>
      %351 = math.absf %330 : vector<8x128xf32>
      %352 = vector.broadcast %73 : f32 to vector<8x128xf32>
      %353 = arith.subf %351, %352 : vector<8x128xf32>
      %cst_232 = arith.constant 0.000000e+00 : f32
      %354 = vector.broadcast %cst_232 : f32 to vector<8x128xf32>
      %355 = arith.maximumf %353, %354 : vector<8x128xf32>
      %356 = math.absf %340 : vector<8x128xf32>
      %357 = vector.broadcast %74 : f32 to vector<8x128xf32>
      %358 = arith.subf %356, %357 : vector<8x128xf32>
      %cst_233 = arith.constant 0.000000e+00 : f32
      %359 = vector.broadcast %cst_233 : f32 to vector<8x128xf32>
      %360 = arith.maximumf %358, %359 : vector<8x128xf32>
      %361 = arith.mulf %355, %355 : vector<8x128xf32>
      %362 = arith.mulf %360, %360 : vector<8x128xf32>
      %363 = arith.addf %361, %362 : vector<8x128xf32>
      %364 = arith.mulf %350, %350 : vector<8x128xf32>
      %365 = arith.addf %363, %364 : vector<8x128xf32>
      %366 = arith.minimumf %320, %365 : vector<8x128xf32>
      %367 = vector.broadcast %75 : f32 to vector<8x128xf32>
      %368 = arith.mulf %131, %367 : vector<8x128xf32>
      %369 = vector.broadcast %76 : f32 to vector<8x128xf32>
      %370 = arith.mulf %134, %369 : vector<8x128xf32>
      %371 = arith.addf %368, %370 : vector<8x128xf32>
      %372 = vector.broadcast %77 : f32 to vector<8x128xf32>
      %373 = arith.mulf %137, %372 : vector<8x128xf32>
      %374 = arith.addf %371, %373 : vector<8x128xf32>
      %375 = vector.broadcast %84 : f32 to vector<8x128xf32>
      %376 = arith.subf %374, %375 : vector<8x128xf32>
      %377 = vector.broadcast %78 : f32 to vector<8x128xf32>
      %378 = arith.mulf %131, %377 : vector<8x128xf32>
      %379 = vector.broadcast %79 : f32 to vector<8x128xf32>
      %380 = arith.mulf %134, %379 : vector<8x128xf32>
      %381 = arith.addf %378, %380 : vector<8x128xf32>
      %382 = vector.broadcast %80 : f32 to vector<8x128xf32>
      %383 = arith.mulf %137, %382 : vector<8x128xf32>
      %384 = arith.addf %381, %383 : vector<8x128xf32>
      %385 = vector.broadcast %85 : f32 to vector<8x128xf32>
      %386 = arith.subf %384, %385 : vector<8x128xf32>
      %387 = vector.broadcast %81 : f32 to vector<8x128xf32>
      %388 = arith.mulf %131, %387 : vector<8x128xf32>
      %389 = vector.broadcast %82 : f32 to vector<8x128xf32>
      %390 = arith.mulf %134, %389 : vector<8x128xf32>
      %391 = arith.addf %388, %390 : vector<8x128xf32>
      %392 = vector.broadcast %83 : f32 to vector<8x128xf32>
      %393 = arith.mulf %137, %392 : vector<8x128xf32>
      %394 = arith.addf %391, %393 : vector<8x128xf32>
      %395 = vector.broadcast %86 : f32 to vector<8x128xf32>
      %396 = arith.subf %394, %395 : vector<8x128xf32>
      %397 = math.absf %376 : vector<8x128xf32>
      %398 = vector.broadcast %87 : f32 to vector<8x128xf32>
      %399 = arith.subf %397, %398 : vector<8x128xf32>
      %cst_234 = arith.constant 0.000000e+00 : f32
      %400 = vector.broadcast %cst_234 : f32 to vector<8x128xf32>
      %401 = arith.maximumf %399, %400 : vector<8x128xf32>
      %402 = math.absf %386 : vector<8x128xf32>
      %403 = vector.broadcast %88 : f32 to vector<8x128xf32>
      %404 = arith.subf %402, %403 : vector<8x128xf32>
      %cst_235 = arith.constant 0.000000e+00 : f32
      %405 = vector.broadcast %cst_235 : f32 to vector<8x128xf32>
      %406 = arith.maximumf %404, %405 : vector<8x128xf32>
      %407 = arith.mulf %401, %401 : vector<8x128xf32>
      %408 = arith.mulf %406, %406 : vector<8x128xf32>
      %409 = arith.addf %407, %408 : vector<8x128xf32>
      %410 = arith.mulf %396, %396 : vector<8x128xf32>
      %411 = arith.addf %409, %410 : vector<8x128xf32>
      %412 = arith.minimumf %366, %411 : vector<8x128xf32>
      %413 = vector.broadcast %89 : f32 to vector<8x128xf32>
      %414 = arith.mulf %131, %413 : vector<8x128xf32>
      %415 = vector.broadcast %90 : f32 to vector<8x128xf32>
      %416 = arith.mulf %134, %415 : vector<8x128xf32>
      %417 = arith.addf %414, %416 : vector<8x128xf32>
      %418 = vector.broadcast %91 : f32 to vector<8x128xf32>
      %419 = arith.mulf %137, %418 : vector<8x128xf32>
      %420 = arith.addf %417, %419 : vector<8x128xf32>
      %421 = vector.broadcast %98 : f32 to vector<8x128xf32>
      %422 = arith.subf %420, %421 : vector<8x128xf32>
      %423 = vector.broadcast %92 : f32 to vector<8x128xf32>
      %424 = arith.mulf %131, %423 : vector<8x128xf32>
      %425 = vector.broadcast %93 : f32 to vector<8x128xf32>
      %426 = arith.mulf %134, %425 : vector<8x128xf32>
      %427 = arith.addf %424, %426 : vector<8x128xf32>
      %428 = vector.broadcast %94 : f32 to vector<8x128xf32>
      %429 = arith.mulf %137, %428 : vector<8x128xf32>
      %430 = arith.addf %427, %429 : vector<8x128xf32>
      %431 = vector.broadcast %99 : f32 to vector<8x128xf32>
      %432 = arith.subf %430, %431 : vector<8x128xf32>
      %433 = vector.broadcast %95 : f32 to vector<8x128xf32>
      %434 = arith.mulf %131, %433 : vector<8x128xf32>
      %435 = vector.broadcast %96 : f32 to vector<8x128xf32>
      %436 = arith.mulf %134, %435 : vector<8x128xf32>
      %437 = arith.addf %434, %436 : vector<8x128xf32>
      %438 = vector.broadcast %97 : f32 to vector<8x128xf32>
      %439 = arith.mulf %137, %438 : vector<8x128xf32>
      %440 = arith.addf %437, %439 : vector<8x128xf32>
      %441 = vector.broadcast %100 : f32 to vector<8x128xf32>
      %442 = arith.subf %440, %441 : vector<8x128xf32>
      %443 = math.absf %422 : vector<8x128xf32>
      %444 = vector.broadcast %101 : f32 to vector<8x128xf32>
      %445 = arith.subf %443, %444 : vector<8x128xf32>
      %cst_236 = arith.constant 0.000000e+00 : f32
      %446 = vector.broadcast %cst_236 : f32 to vector<8x128xf32>
      %447 = arith.maximumf %445, %446 : vector<8x128xf32>
      %448 = math.absf %432 : vector<8x128xf32>
      %449 = vector.broadcast %102 : f32 to vector<8x128xf32>
      %450 = arith.subf %448, %449 : vector<8x128xf32>
      %cst_237 = arith.constant 0.000000e+00 : f32
      %451 = vector.broadcast %cst_237 : f32 to vector<8x128xf32>
      %452 = arith.maximumf %450, %451 : vector<8x128xf32>
      %453 = arith.mulf %447, %447 : vector<8x128xf32>
      %454 = arith.mulf %452, %452 : vector<8x128xf32>
      %455 = arith.addf %453, %454 : vector<8x128xf32>
      %456 = arith.mulf %442, %442 : vector<8x128xf32>
      %457 = arith.addf %455, %456 : vector<8x128xf32>
      %458 = arith.minimumf %412, %457 : vector<8x128xf32>
      %459 = vector.broadcast %103 : f32 to vector<8x128xf32>
      %460 = arith.mulf %131, %459 : vector<8x128xf32>
      %461 = vector.broadcast %104 : f32 to vector<8x128xf32>
      %462 = arith.mulf %134, %461 : vector<8x128xf32>
      %463 = arith.addf %460, %462 : vector<8x128xf32>
      %464 = vector.broadcast %105 : f32 to vector<8x128xf32>
      %465 = arith.mulf %137, %464 : vector<8x128xf32>
      %466 = arith.addf %463, %465 : vector<8x128xf32>
      %467 = vector.broadcast %112 : f32 to vector<8x128xf32>
      %468 = arith.subf %466, %467 : vector<8x128xf32>
      %469 = vector.broadcast %106 : f32 to vector<8x128xf32>
      %470 = arith.mulf %131, %469 : vector<8x128xf32>
      %471 = vector.broadcast %107 : f32 to vector<8x128xf32>
      %472 = arith.mulf %134, %471 : vector<8x128xf32>
      %473 = arith.addf %470, %472 : vector<8x128xf32>
      %474 = vector.broadcast %108 : f32 to vector<8x128xf32>
      %475 = arith.mulf %137, %474 : vector<8x128xf32>
      %476 = arith.addf %473, %475 : vector<8x128xf32>
      %477 = vector.broadcast %113 : f32 to vector<8x128xf32>
      %478 = arith.subf %476, %477 : vector<8x128xf32>
      %479 = vector.broadcast %109 : f32 to vector<8x128xf32>
      %480 = arith.mulf %131, %479 : vector<8x128xf32>
      %481 = vector.broadcast %110 : f32 to vector<8x128xf32>
      %482 = arith.mulf %134, %481 : vector<8x128xf32>
      %483 = arith.addf %480, %482 : vector<8x128xf32>
      %484 = vector.broadcast %111 : f32 to vector<8x128xf32>
      %485 = arith.mulf %137, %484 : vector<8x128xf32>
      %486 = arith.addf %483, %485 : vector<8x128xf32>
      %487 = vector.broadcast %114 : f32 to vector<8x128xf32>
      %488 = arith.subf %486, %487 : vector<8x128xf32>
      %489 = math.absf %468 : vector<8x128xf32>
      %490 = vector.broadcast %115 : f32 to vector<8x128xf32>
      %491 = arith.subf %489, %490 : vector<8x128xf32>
      %cst_238 = arith.constant 0.000000e+00 : f32
      %492 = vector.broadcast %cst_238 : f32 to vector<8x128xf32>
      %493 = arith.maximumf %491, %492 : vector<8x128xf32>
      %494 = math.absf %478 : vector<8x128xf32>
      %495 = vector.broadcast %116 : f32 to vector<8x128xf32>
      %496 = arith.subf %494, %495 : vector<8x128xf32>
      %cst_239 = arith.constant 0.000000e+00 : f32
      %497 = vector.broadcast %cst_239 : f32 to vector<8x128xf32>
      %498 = arith.maximumf %496, %497 : vector<8x128xf32>
      %499 = arith.mulf %493, %493 : vector<8x128xf32>
      %500 = arith.mulf %498, %498 : vector<8x128xf32>
      %501 = arith.addf %499, %500 : vector<8x128xf32>
      %502 = arith.mulf %488, %488 : vector<8x128xf32>
      %503 = arith.addf %501, %502 : vector<8x128xf32>
      %504 = arith.minimumf %458, %503 : vector<8x128xf32>
      %505 = arith.addf %126, %504 : vector<8x128xf32>
      %c1_i32_240 = arith.constant 1 : i32
      %c0_241 = arith.constant 0 : index
      %c0_242 = arith.constant 0 : index
      %506 = vector.load %arg5[%c0_241, %c0_242] : memref<8x128xf32, #tpu.memory_space<vmem>>, vector<8x128xf32>
      %507 = arith.addf %506, %505 : vector<8x128xf32>
      %c0_243 = arith.constant 0 : index
      %c0_244 = arith.constant 0 : index
      %508 = vector.load %arg5[%c0_243, %c0_244] : memref<8x128xf32, #tpu.memory_space<vmem>>, vector<8x128xf32>
      tpu.vector_store %arg5[%c0_243, %c0_244], %507 {strides = array<i32>} : memref<8x128xf32, #tpu.memory_space<vmem>>, vector<8x128xf32>,
    } else {
    }
    %c0_i32_213 = arith.constant 0 : i32
    %120 = arith.cmpi sge, %1, %c0_i32_213 : i32
    %121 = arith.extui %120 : i1 to i32
    %c0_i32_214 = arith.constant 0 : i32
    %122 = arith.cmpi ne, %121, %c0_i32_214 : i32
    scf.if %122 {
      %cst = arith.constant 0.000000e+00 : f32
      %126 = vector.broadcast %cst : f32 to vector<8x128xf32>
      %c0_i32_217 = arith.constant 0 : i32
      %c8_i32 = arith.constant 8 : i32
      %127 = arith.muli %c0_i32_217, %c8_i32 : i32
      %128 = tpu.assume_multiple %127, 8 : i32
      %c0_218 = arith.constant 0 : index
      %129 = arith.index_cast %128 : i32 to index
      %c0_219 = arith.constant 0 : index
      %130 = vector.load %arg3[%c0_218, %129, %c0_219] : memref<3x8x128xf32, #tpu.memory_space<vmem>>, vector<1x8x128xf32>
      %131 = vector.shape_cast %130 : vector<1x8x128xf32> to vector<8x128xf32>
      %c1_220 = arith.constant 1 : index
      %132 = arith.index_cast %128 : i32 to index
      %c0_221 = arith.constant 0 : index
      %133 = vector.load %arg3[%c1_220, %132, %c0_221] : memref<3x8x128xf32, #tpu.memory_space<vmem>>, vector<1x8x128xf32>
      %134 = vector.shape_cast %133 : vector<1x8x128xf32> to vector<8x128xf32>
      %c2_222 = arith.constant 2 : index
      %135 = arith.index_cast %128 : i32 to index
      %c0_223 = arith.constant 0 : index
      %136 = vector.load %arg3[%c2_222, %135, %c0_223] : memref<3x8x128xf32, #tpu.memory_space<vmem>>, vector<1x8x128xf32>
      %137 = vector.shape_cast %136 : vector<1x8x128xf32> to vector<8x128xf32>
      %138 = vector.broadcast %5 : f32 to vector<8x128xf32>
      %139 = arith.mulf %131, %138 : vector<8x128xf32>
      %140 = vector.broadcast %6 : f32 to vector<8x128xf32>
      %141 = arith.mulf %134, %140 : vector<8x128xf32>
      %142 = arith.addf %139, %141 : vector<8x128xf32>
      %143 = vector.broadcast %7 : f32 to vector<8x128xf32>
      %144 = arith.mulf %137, %143 : vector<8x128xf32>
      %145 = arith.addf %142, %144 : vector<8x128xf32>
      %146 = vector.broadcast %14 : f32 to vector<8x128xf32>
      %147 = arith.subf %145, %146 : vector<8x128xf32>
      %148 = vector.broadcast %8 : f32 to vector<8x128xf32>
      %149 = arith.mulf %131, %148 : vector<8x128xf32>
      %150 = vector.broadcast %9 : f32 to vector<8x128xf32>
      %151 = arith.mulf %134, %150 : vector<8x128xf32>
      %152 = arith.addf %149, %151 : vector<8x128xf32>
      %153 = vector.broadcast %10 : f32 to vector<8x128xf32>
      %154 = arith.mulf %137, %153 : vector<8x128xf32>
      %155 = arith.addf %152, %154 : vector<8x128xf32>
      %156 = vector.broadcast %15 : f32 to vector<8x128xf32>
      %157 = arith.subf %155, %156 : vector<8x128xf32>
      %158 = vector.broadcast %11 : f32 to vector<8x128xf32>
      %159 = arith.mulf %131, %158 : vector<8x128xf32>
      %160 = vector.broadcast %12 : f32 to vector<8x128xf32>
      %161 = arith.mulf %134, %160 : vector<8x128xf32>
      %162 = arith.addf %159, %161 : vector<8x128xf32>
      %163 = vector.broadcast %13 : f32 to vector<8x128xf32>
      %164 = arith.mulf %137, %163 : vector<8x128xf32>
      %165 = arith.addf %162, %164 : vector<8x128xf32>
      %166 = vector.broadcast %16 : f32 to vector<8x128xf32>
      %167 = arith.subf %165, %166 : vector<8x128xf32>
      %168 = math.absf %147 : vector<8x128xf32>
      %169 = vector.broadcast %17 : f32 to vector<8x128xf32>
      %170 = arith.subf %168, %169 : vector<8x128xf32>
      %cst_224 = arith.constant 0.000000e+00 : f32
      %171 = vector.broadcast %cst_224 : f32 to vector<8x128xf32>
      %172 = arith.maximumf %170, %171 : vector<8x128xf32>
      %173 = math.absf %157 : vector<8x128xf32>
      %174 = vector.broadcast %18 : f32 to vector<8x128xf32>
      %175 = arith.subf %173, %174 : vector<8x128xf32>
      %cst_225 = arith.constant 0.000000e+00 : f32
      %176 = vector.broadcast %cst_225 : f32 to vector<8x128xf32>
      %177 = arith.maximumf %175, %176 : vector<8x128xf32>
      %178 = arith.mulf %172, %172 : vector<8x128xf32>
      %179 = arith.mulf %177, %177 : vector<8x128xf32>
      %180 = arith.addf %178, %179 : vector<8x128xf32>
      %181 = arith.mulf %167, %167 : vector<8x128xf32>
      %182 = arith.addf %180, %181 : vector<8x128xf32>
      %183 = vector.broadcast %19 : f32 to vector<8x128xf32>
      %184 = arith.mulf %131, %183 : vector<8x128xf32>
      %185 = vector.broadcast %20 : f32 to vector<8x128xf32>
      %186 = arith.mulf %134, %185 : vector<8x128xf32>
      %187 = arith.addf %184, %186 : vector<8x128xf32>
      %188 = vector.broadcast %21 : f32 to vector<8x128xf32>
      %189 = arith.mulf %137, %188 : vector<8x128xf32>
      %190 = arith.addf %187, %189 : vector<8x128xf32>
      %191 = vector.broadcast %28 : f32 to vector<8x128xf32>
      %192 = arith.subf %190, %191 : vector<8x128xf32>
      %193 = vector.broadcast %22 : f32 to vector<8x128xf32>
      %194 = arith.mulf %131, %193 : vector<8x128xf32>
      %195 = vector.broadcast %23 : f32 to vector<8x128xf32>
      %196 = arith.mulf %134, %195 : vector<8x128xf32>
      %197 = arith.addf %194, %196 : vector<8x128xf32>
      %198 = vector.broadcast %24 : f32 to vector<8x128xf32>
      %199 = arith.mulf %137, %198 : vector<8x128xf32>
      %200 = arith.addf %197, %199 : vector<8x128xf32>
      %201 = vector.broadcast %29 : f32 to vector<8x128xf32>
      %202 = arith.subf %200, %201 : vector<8x128xf32>
      %203 = vector.broadcast %25 : f32 to vector<8x128xf32>
      %204 = arith.mulf %131, %203 : vector<8x128xf32>
      %205 = vector.broadcast %26 : f32 to vector<8x128xf32>
      %206 = arith.mulf %134, %205 : vector<8x128xf32>
      %207 = arith.addf %204, %206 : vector<8x128xf32>
      %208 = vector.broadcast %27 : f32 to vector<8x128xf32>
      %209 = arith.mulf %137, %208 : vector<8x128xf32>
      %210 = arith.addf %207, %209 : vector<8x128xf32>
      %211 = vector.broadcast %30 : f32 to vector<8x128xf32>
      %212 = arith.subf %210, %211 : vector<8x128xf32>
      %213 = math.absf %192 : vector<8x128xf32>
      %214 = vector.broadcast %31 : f32 to vector<8x128xf32>
      %215 = arith.subf %213, %214 : vector<8x128xf32>
      %cst_226 = arith.constant 0.000000e+00 : f32
      %216 = vector.broadcast %cst_226 : f32 to vector<8x128xf32>
      %217 = arith.maximumf %215, %216 : vector<8x128xf32>
      %218 = math.absf %202 : vector<8x128xf32>
      %219 = vector.broadcast %32 : f32 to vector<8x128xf32>
      %220 = arith.subf %218, %219 : vector<8x128xf32>
      %cst_227 = arith.constant 0.000000e+00 : f32
      %221 = vector.broadcast %cst_227 : f32 to vector<8x128xf32>
      %222 = arith.maximumf %220, %221 : vector<8x128xf32>
      %223 = arith.mulf %217, %217 : vector<8x128xf32>
      %224 = arith.mulf %222, %222 : vector<8x128xf32>
      %225 = arith.addf %223, %224 : vector<8x128xf32>
      %226 = arith.mulf %212, %212 : vector<8x128xf32>
      %227 = arith.addf %225, %226 : vector<8x128xf32>
      %228 = arith.minimumf %182, %227 : vector<8x128xf32>
      %229 = vector.broadcast %33 : f32 to vector<8x128xf32>
      %230 = arith.mulf %131, %229 : vector<8x128xf32>
      %231 = vector.broadcast %34 : f32 to vector<8x128xf32>
      %232 = arith.mulf %134, %231 : vector<8x128xf32>
      %233 = arith.addf %230, %232 : vector<8x128xf32>
      %234 = vector.broadcast %35 : f32 to vector<8x128xf32>
      %235 = arith.mulf %137, %234 : vector<8x128xf32>
      %236 = arith.addf %233, %235 : vector<8x128xf32>
      %237 = vector.broadcast %42 : f32 to vector<8x128xf32>
      %238 = arith.subf %236, %237 : vector<8x128xf32>
      %239 = vector.broadcast %36 : f32 to vector<8x128xf32>
      %240 = arith.mulf %131, %239 : vector<8x128xf32>
      %241 = vector.broadcast %37 : f32 to vector<8x128xf32>
      %242 = arith.mulf %134, %241 : vector<8x128xf32>
      %243 = arith.addf %240, %242 : vector<8x128xf32>
      %244 = vector.broadcast %38 : f32 to vector<8x128xf32>
      %245 = arith.mulf %137, %244 : vector<8x128xf32>
      %246 = arith.addf %243, %245 : vector<8x128xf32>
      %247 = vector.broadcast %43 : f32 to vector<8x128xf32>
      %248 = arith.subf %246, %247 : vector<8x128xf32>
      %249 = vector.broadcast %39 : f32 to vector<8x128xf32>
      %250 = arith.mulf %131, %249 : vector<8x128xf32>
      %251 = vector.broadcast %40 : f32 to vector<8x128xf32>
      %252 = arith.mulf %134, %251 : vector<8x128xf32>
      %253 = arith.addf %250, %252 : vector<8x128xf32>
      %254 = vector.broadcast %41 : f32 to vector<8x128xf32>
      %255 = arith.mulf %137, %254 : vector<8x128xf32>
      %256 = arith.addf %253, %255 : vector<8x128xf32>
      %257 = vector.broadcast %44 : f32 to vector<8x128xf32>
      %258 = arith.subf %256, %257 : vector<8x128xf32>
      %259 = math.absf %238 : vector<8x128xf32>
      %260 = vector.broadcast %45 : f32 to vector<8x128xf32>
      %261 = arith.subf %259, %260 : vector<8x128xf32>
      %cst_228 = arith.constant 0.000000e+00 : f32
      %262 = vector.broadcast %cst_228 : f32 to vector<8x128xf32>
      %263 = arith.maximumf %261, %262 : vector<8x128xf32>
      %264 = math.absf %248 : vector<8x128xf32>
      %265 = vector.broadcast %46 : f32 to vector<8x128xf32>
      %266 = arith.subf %264, %265 : vector<8x128xf32>
      %cst_229 = arith.constant 0.000000e+00 : f32
      %267 = vector.broadcast %cst_229 : f32 to vector<8x128xf32>
      %268 = arith.maximumf %266, %267 : vector<8x128xf32>
      %269 = arith.mulf %263, %263 : vector<8x128xf32>
      %270 = arith.mulf %268, %268 : vector<8x128xf32>
      %271 = arith.addf %269, %270 : vector<8x128xf32>
      %272 = arith.mulf %258, %258 : vector<8x128xf32>
      %273 = arith.addf %271, %272 : vector<8x128xf32>
      %274 = arith.minimumf %228, %273 : vector<8x128xf32>
      %275 = vector.broadcast %47 : f32 to vector<8x128xf32>
      %276 = arith.mulf %131, %275 : vector<8x128xf32>
      %277 = vector.broadcast %48 : f32 to vector<8x128xf32>
      %278 = arith.mulf %134, %277 : vector<8x128xf32>
      %279 = arith.addf %276, %278 : vector<8x128xf32>
      %280 = vector.broadcast %49 : f32 to vector<8x128xf32>
      %281 = arith.mulf %137, %280 : vector<8x128xf32>
      %282 = arith.addf %279, %281 : vector<8x128xf32>
      %283 = vector.broadcast %56 : f32 to vector<8x128xf32>
      %284 = arith.subf %282, %283 : vector<8x128xf32>
      %285 = vector.broadcast %50 : f32 to vector<8x128xf32>
      %286 = arith.mulf %131, %285 : vector<8x128xf32>
      %287 = vector.broadcast %51 : f32 to vector<8x128xf32>
      %288 = arith.mulf %134, %287 : vector<8x128xf32>
      %289 = arith.addf %286, %288 : vector<8x128xf32>
      %290 = vector.broadcast %52 : f32 to vector<8x128xf32>
      %291 = arith.mulf %137, %290 : vector<8x128xf32>
      %292 = arith.addf %289, %291 : vector<8x128xf32>
      %293 = vector.broadcast %57 : f32 to vector<8x128xf32>
      %294 = arith.subf %292, %293 : vector<8x128xf32>
      %295 = vector.broadcast %53 : f32 to vector<8x128xf32>
      %296 = arith.mulf %131, %295 : vector<8x128xf32>
      %297 = vector.broadcast %54 : f32 to vector<8x128xf32>
      %298 = arith.mulf %134, %297 : vector<8x128xf32>
      %299 = arith.addf %296, %298 : vector<8x128xf32>
      %300 = vector.broadcast %55 : f32 to vector<8x128xf32>
      %301 = arith.mulf %137, %300 : vector<8x128xf32>
      %302 = arith.addf %299, %301 : vector<8x128xf32>
      %303 = vector.broadcast %58 : f32 to vector<8x128xf32>
      %304 = arith.subf %302, %303 : vector<8x128xf32>
      %305 = math.absf %284 : vector<8x128xf32>
      %306 = vector.broadcast %59 : f32 to vector<8x128xf32>
      %307 = arith.subf %305, %306 : vector<8x128xf32>
      %cst_230 = arith.constant 0.000000e+00 : f32
      %308 = vector.broadcast %cst_230 : f32 to vector<8x128xf32>
      %309 = arith.maximumf %307, %308 : vector<8x128xf32>
      %310 = math.absf %294 : vector<8x128xf32>
      %311 = vector.broadcast %60 : f32 to vector<8x128xf32>
      %312 = arith.subf %310, %311 : vector<8x128xf32>
      %cst_231 = arith.constant 0.000000e+00 : f32
      %313 = vector.broadcast %cst_231 : f32 to vector<8x128xf32>
      %314 = arith.maximumf %312, %313 : vector<8x128xf32>
      %315 = arith.mulf %309, %309 : vector<8x128xf32>
      %316 = arith.mulf %314, %314 : vector<8x128xf32>
      %317 = arith.addf %315, %316 : vector<8x128xf32>
      %318 = arith.mulf %304, %304 : vector<8x128xf32>
      %319 = arith.addf %317, %318 : vector<8x128xf32>
      %320 = arith.minimumf %274, %319 : vector<8x128xf32>
      %321 = vector.broadcast %61 : f32 to vector<8x128xf32>
      %322 = arith.mulf %131, %321 : vector<8x128xf32>
      %323 = vector.broadcast %62 : f32 to vector<8x128xf32>
      %324 = arith.mulf %134, %323 : vector<8x128xf32>
      %325 = arith.addf %322, %324 : vector<8x128xf32>
      %326 = vector.broadcast %63 : f32 to vector<8x128xf32>
      %327 = arith.mulf %137, %326 : vector<8x128xf32>
      %328 = arith.addf %325, %327 : vector<8x128xf32>
      %329 = vector.broadcast %70 : f32 to vector<8x128xf32>
      %330 = arith.subf %328, %329 : vector<8x128xf32>
      %331 = vector.broadcast %64 : f32 to vector<8x128xf32>
      %332 = arith.mulf %131, %331 : vector<8x128xf32>
      %333 = vector.broadcast %65 : f32 to vector<8x128xf32>
      %334 = arith.mulf %134, %333 : vector<8x128xf32>
      %335 = arith.addf %332, %334 : vector<8x128xf32>
      %336 = vector.broadcast %66 : f32 to vector<8x128xf32>
      %337 = arith.mulf %137, %336 : vector<8x128xf32>
      %338 = arith.addf %335, %337 : vector<8x128xf32>
      %339 = vector.broadcast %71 : f32 to vector<8x128xf32>
      %340 = arith.subf %338, %339 : vector<8x128xf32>
      %341 = vector.broadcast %67 : f32 to vector<8x128xf32>
      %342 = arith.mulf %131, %341 : vector<8x128xf32>
      %343 = vector.broadcast %68 : f32 to vector<8x128xf32>
      %344 = arith.mulf %134, %343 : vector<8x128xf32>
      %345 = arith.addf %342, %344 : vector<8x128xf32>
      %346 = vector.broadcast %69 : f32 to vector<8x128xf32>
      %347 = arith.mulf %137, %346 : vector<8x128xf32>
      %348 = arith.addf %345, %347 : vector<8x128xf32>
      %349 = vector.broadcast %72 : f32 to vector<8x128xf32>
      %350 = arith.subf %348, %349 : vector<8x128xf32>
      %351 = math.absf %330 : vector<8x128xf32>
      %352 = vector.broadcast %73 : f32 to vector<8x128xf32>
      %353 = arith.subf %351, %352 : vector<8x128xf32>
      %cst_232 = arith.constant 0.000000e+00 : f32
      %354 = vector.broadcast %cst_232 : f32 to vector<8x128xf32>
      %355 = arith.maximumf %353, %354 : vector<8x128xf32>
      %356 = math.absf %340 : vector<8x128xf32>
      %357 = vector.broadcast %74 : f32 to vector<8x128xf32>
      %358 = arith.subf %356, %357 : vector<8x128xf32>
      %cst_233 = arith.constant 0.000000e+00 : f32
      %359 = vector.broadcast %cst_233 : f32 to vector<8x128xf32>
      %360 = arith.maximumf %358, %359 : vector<8x128xf32>
      %361 = arith.mulf %355, %355 : vector<8x128xf32>
      %362 = arith.mulf %360, %360 : vector<8x128xf32>
      %363 = arith.addf %361, %362 : vector<8x128xf32>
      %364 = arith.mulf %350, %350 : vector<8x128xf32>
      %365 = arith.addf %363, %364 : vector<8x128xf32>
      %366 = arith.minimumf %320, %365 : vector<8x128xf32>
      %367 = vector.broadcast %75 : f32 to vector<8x128xf32>
      %368 = arith.mulf %131, %367 : vector<8x128xf32>
      %369 = vector.broadcast %76 : f32 to vector<8x128xf32>
      %370 = arith.mulf %134, %369 : vector<8x128xf32>
      %371 = arith.addf %368, %370 : vector<8x128xf32>
      %372 = vector.broadcast %77 : f32 to vector<8x128xf32>
      %373 = arith.mulf %137, %372 : vector<8x128xf32>
      %374 = arith.addf %371, %373 : vector<8x128xf32>
      %375 = vector.broadcast %84 : f32 to vector<8x128xf32>
      %376 = arith.subf %374, %375 : vector<8x128xf32>
      %377 = vector.broadcast %78 : f32 to vector<8x128xf32>
      %378 = arith.mulf %131, %377 : vector<8x128xf32>
      %379 = vector.broadcast %79 : f32 to vector<8x128xf32>
      %380 = arith.mulf %134, %379 : vector<8x128xf32>
      %381 = arith.addf %378, %380 : vector<8x128xf32>
      %382 = vector.broadcast %80 : f32 to vector<8x128xf32>
      %383 = arith.mulf %137, %382 : vector<8x128xf32>
      %384 = arith.addf %381, %383 : vector<8x128xf32>
      %385 = vector.broadcast %85 : f32 to vector<8x128xf32>
      %386 = arith.subf %384, %385 : vector<8x128xf32>
      %387 = vector.broadcast %81 : f32 to vector<8x128xf32>
      %388 = arith.mulf %131, %387 : vector<8x128xf32>
      %389 = vector.broadcast %82 : f32 to vector<8x128xf32>
      %390 = arith.mulf %134, %389 : vector<8x128xf32>
      %391 = arith.addf %388, %390 : vector<8x128xf32>
      %392 = vector.broadcast %83 : f32 to vector<8x128xf32>
      %393 = arith.mulf %137, %392 : vector<8x128xf32>
      %394 = arith.addf %391, %393 : vector<8x128xf32>
      %395 = vector.broadcast %86 : f32 to vector<8x128xf32>
      %396 = arith.subf %394, %395 : vector<8x128xf32>
      %397 = math.absf %376 : vector<8x128xf32>
      %398 = vector.broadcast %87 : f32 to vector<8x128xf32>
      %399 = arith.subf %397, %398 : vector<8x128xf32>
      %cst_234 = arith.constant 0.000000e+00 : f32
      %400 = vector.broadcast %cst_234 : f32 to vector<8x128xf32>
      %401 = arith.maximumf %399, %400 : vector<8x128xf32>
      %402 = math.absf %386 : vector<8x128xf32>
      %403 = vector.broadcast %88 : f32 to vector<8x128xf32>
      %404 = arith.subf %402, %403 : vector<8x128xf32>
      %cst_235 = arith.constant 0.000000e+00 : f32
      %405 = vector.broadcast %cst_235 : f32 to vector<8x128xf32>
      %406 = arith.maximumf %404, %405 : vector<8x128xf32>
      %407 = arith.mulf %401, %401 : vector<8x128xf32>
      %408 = arith.mulf %406, %406 : vector<8x128xf32>
      %409 = arith.addf %407, %408 : vector<8x128xf32>
      %410 = arith.mulf %396, %396 : vector<8x128xf32>
      %411 = arith.addf %409, %410 : vector<8x128xf32>
      %412 = arith.minimumf %366, %411 : vector<8x128xf32>
      %413 = vector.broadcast %89 : f32 to vector<8x128xf32>
      %414 = arith.mulf %131, %413 : vector<8x128xf32>
      %415 = vector.broadcast %90 : f32 to vector<8x128xf32>
      %416 = arith.mulf %134, %415 : vector<8x128xf32>
      %417 = arith.addf %414, %416 : vector<8x128xf32>
      %418 = vector.broadcast %91 : f32 to vector<8x128xf32>
      %419 = arith.mulf %137, %418 : vector<8x128xf32>
      %420 = arith.addf %417, %419 : vector<8x128xf32>
      %421 = vector.broadcast %98 : f32 to vector<8x128xf32>
      %422 = arith.subf %420, %421 : vector<8x128xf32>
      %423 = vector.broadcast %92 : f32 to vector<8x128xf32>
      %424 = arith.mulf %131, %423 : vector<8x128xf32>
      %425 = vector.broadcast %93 : f32 to vector<8x128xf32>
      %426 = arith.mulf %134, %425 : vector<8x128xf32>
      %427 = arith.addf %424, %426 : vector<8x128xf32>
      %428 = vector.broadcast %94 : f32 to vector<8x128xf32>
      %429 = arith.mulf %137, %428 : vector<8x128xf32>
      %430 = arith.addf %427, %429 : vector<8x128xf32>
      %431 = vector.broadcast %99 : f32 to vector<8x128xf32>
      %432 = arith.subf %430, %431 : vector<8x128xf32>
      %433 = vector.broadcast %95 : f32 to vector<8x128xf32>
      %434 = arith.mulf %131, %433 : vector<8x128xf32>
      %435 = vector.broadcast %96 : f32 to vector<8x128xf32>
      %436 = arith.mulf %134, %435 : vector<8x128xf32>
      %437 = arith.addf %434, %436 : vector<8x128xf32>
      %438 = vector.broadcast %97 : f32 to vector<8x128xf32>
      %439 = arith.mulf %137, %438 : vector<8x128xf32>
      %440 = arith.addf %437, %439 : vector<8x128xf32>
      %441 = vector.broadcast %100 : f32 to vector<8x128xf32>
      %442 = arith.subf %440, %441 : vector<8x128xf32>
      %443 = math.absf %422 : vector<8x128xf32>
      %444 = vector.broadcast %101 : f32 to vector<8x128xf32>
      %445 = arith.subf %443, %444 : vector<8x128xf32>
      %cst_236 = arith.constant 0.000000e+00 : f32
      %446 = vector.broadcast %cst_236 : f32 to vector<8x128xf32>
      %447 = arith.maximumf %445, %446 : vector<8x128xf32>
      %448 = math.absf %432 : vector<8x128xf32>
      %449 = vector.broadcast %102 : f32 to vector<8x128xf32>
      %450 = arith.subf %448, %449 : vector<8x128xf32>
      %cst_237 = arith.constant 0.000000e+00 : f32
      %451 = vector.broadcast %cst_237 : f32 to vector<8x128xf32>
      %452 = arith.maximumf %450, %451 : vector<8x128xf32>
      %453 = arith.mulf %447, %447 : vector<8x128xf32>
      %454 = arith.mulf %452, %452 : vector<8x128xf32>
      %455 = arith.addf %453, %454 : vector<8x128xf32>
      %456 = arith.mulf %442, %442 : vector<8x128xf32>
      %457 = arith.addf %455, %456 : vector<8x128xf32>
      %458 = arith.minimumf %412, %457 : vector<8x128xf32>
      %459 = vector.broadcast %103 : f32 to vector<8x128xf32>
      %460 = arith.mulf %131, %459 : vector<8x128xf32>
      %461 = vector.broadcast %104 : f32 to vector<8x128xf32>
      %462 = arith.mulf %134, %461 : vector<8x128xf32>
      %463 = arith.addf %460, %462 : vector<8x128xf32>
      %464 = vector.broadcast %105 : f32 to vector<8x128xf32>
      %465 = arith.mulf %137, %464 : vector<8x128xf32>
      %466 = arith.addf %463, %465 : vector<8x128xf32>
      %467 = vector.broadcast %112 : f32 to vector<8x128xf32>
      %468 = arith.subf %466, %467 : vector<8x128xf32>
      %469 = vector.broadcast %106 : f32 to vector<8x128xf32>
      %470 = arith.mulf %131, %469 : vector<8x128xf32>
      %471 = vector.broadcast %107 : f32 to vector<8x128xf32>
      %472 = arith.mulf %134, %471 : vector<8x128xf32>
      %473 = arith.addf %470, %472 : vector<8x128xf32>
      %474 = vector.broadcast %108 : f32 to vector<8x128xf32>
      %475 = arith.mulf %137, %474 : vector<8x128xf32>
      %476 = arith.addf %473, %475 : vector<8x128xf32>
      %477 = vector.broadcast %113 : f32 to vector<8x128xf32>
      %478 = arith.subf %476, %477 : vector<8x128xf32>
      %479 = vector.broadcast %109 : f32 to vector<8x128xf32>
      %480 = arith.mulf %131, %479 : vector<8x128xf32>
      %481 = vector.broadcast %110 : f32 to vector<8x128xf32>
      %482 = arith.mulf %134, %481 : vector<8x128xf32>
      %483 = arith.addf %480, %482 : vector<8x128xf32>
      %484 = vector.broadcast %111 : f32 to vector<8x128xf32>
      %485 = arith.mulf %137, %484 : vector<8x128xf32>
      %486 = arith.addf %483, %485 : vector<8x128xf32>
      %487 = vector.broadcast %114 : f32 to vector<8x128xf32>
      %488 = arith.subf %486, %487 : vector<8x128xf32>
      %489 = math.absf %468 : vector<8x128xf32>
      %490 = vector.broadcast %115 : f32 to vector<8x128xf32>
      %491 = arith.subf %489, %490 : vector<8x128xf32>
      %cst_238 = arith.constant 0.000000e+00 : f32
      %492 = vector.broadcast %cst_238 : f32 to vector<8x128xf32>
      %493 = arith.maximumf %491, %492 : vector<8x128xf32>
      %494 = math.absf %478 : vector<8x128xf32>
      %495 = vector.broadcast %116 : f32 to vector<8x128xf32>
      %496 = arith.subf %494, %495 : vector<8x128xf32>
      %cst_239 = arith.constant 0.000000e+00 : f32
      %497 = vector.broadcast %cst_239 : f32 to vector<8x128xf32>
      %498 = arith.maximumf %496, %497 : vector<8x128xf32>
      %499 = arith.mulf %493, %493 : vector<8x128xf32>
      %500 = arith.mulf %498, %498 : vector<8x128xf32>
      %501 = arith.addf %499, %500 : vector<8x128xf32>
      %502 = arith.mulf %488, %488 : vector<8x128xf32>
      %503 = arith.addf %501, %502 : vector<8x128xf32>
      %504 = arith.minimumf %458, %503 : vector<8x128xf32>
      %505 = tpu.iota {dimensions = array<i32: 0>} : vector<8x128xi32>
      %506 = tpu.iota {dimensions = array<i32: 1>} : vector<8x128xi32>
      %c1024_i32 = arith.constant 1024 : i32
      %507 = arith.muli %1, %c1024_i32 : i32
      %508 = vector.broadcast %128 : i32 to vector<8x128xi32>
      %509 = arith.addi %508, %505 : vector<8x128xi32>
      %c128_i32 = arith.constant 128 : i32
      %510 = vector.broadcast %c128_i32 : i32 to vector<8x128xi32>
      %511 = arith.muli %509, %510 : vector<8x128xi32>
      %512 = vector.broadcast %507 : i32 to vector<8x128xi32>
      %513 = arith.addi %512, %511 : vector<8x128xi32>
      %514 = arith.addi %513, %506 : vector<8x128xi32>
      %c500_i32 = arith.constant 500 : i32
      %515 = vector.broadcast %c500_i32 : i32 to vector<8x128xi32>
      %516 = arith.cmpi slt, %514, %515 : vector<8x128xi32>
      %cst_240 = arith.constant 0.000000e+00 : f32
      %517 = vector.broadcast %cst_240 : f32 to vector<8x128xf32>
      %518 = arith.select %516, %504, %517 : vector<8x128xi1>, vector<8x128xf32>
      %519 = arith.addf %126, %518 : vector<8x128xf32>
      %c1_i32_241 = arith.constant 1 : i32
      %c0_242 = arith.constant 0 : index
      %c0_243 = arith.constant 0 : index
      %520 = vector.load %arg5[%c0_242, %c0_243] : memref<8x128xf32, #tpu.memory_space<vmem>>, vector<8x128xf32>
      %521 = arith.addf %520, %519 : vector<8x128xf32>
      %c0_244 = arith.constant 0 : index
      %c0_245 = arith.constant 0 : index
      %522 = vector.load %arg5[%c0_244, %c0_245] : memref<8x128xf32, #tpu.memory_space<vmem>>, vector<8x128xf32>
      tpu.vector_store %arg5[%c0_244, %c0_245], %521 {strides = array<i32>} : memref<8x128xf32, #tpu.memory_space<vmem>>, vector<8x128xf32>,
    } else {
    }
    %c0_i32_215 = arith.constant 0 : i32
    %123 = arith.cmpi eq, %arg1, %c0_i32_215 : i32
    %124 = arith.extui %123 : i1 to i32
    %c0_i32_216 = arith.constant 0 : i32
    %125 = arith.cmpi ne, %124, %c0_i32_216 : i32
    scf.if %125 {
      %c0_217 = arith.constant 0 : index
      %c0_218 = arith.constant 0 : index
      %126 = vector.load %arg5[%c0_217, %c0_218] : memref<8x128xf32, #tpu.memory_space<vmem>>, vector<8x128xf32>
      %127 = vector.shape_cast %126 : vector<8x128xf32> to vector<1x8x128xf32>
      %c0_219 = arith.constant 0 : index
      %c0_220 = arith.constant 0 : index
      %c0_221 = arith.constant 0 : index
      %128 = vector.load %arg4[%c0_219, %c0_220, %c0_221] : memref<1x8x128xf32, #tpu.memory_space<vmem>>, vector<1x8x128xf32>
      tpu.vector_store %arg4[%c0_219, %c0_220, %c0_221], %127 {strides = array<i32>} : memref<1x8x128xf32, #tpu.memory_space<vmem>>, vector<1x8x128xf32>,
    } else {
    }
    return
  }
  func.func @transform_0(%arg0: i32, %arg1: i32) -> (i32, i32) {
    %c0_i32 = arith.constant 0 : i32
    %c0_i32_0 = arith.constant 0 : i32
    %c0_i32_1 = arith.constant 0 : i32
    return %c0_i32, %c0_i32_0 : i32, i32
  }
  func.func @transform_1(%arg0: i32, %arg1: i32) -> (i32, i32, i32) {
    %c1_i32 = arith.constant 1 : i32
    %0 = arith.muli %arg0, %c1_i32 : i32
    %1 = arith.addi %0, %arg1 : i32
    %c0_i32 = arith.constant 0 : i32
    %c0_i32_0 = arith.constant 0 : i32
    %c0_i32_1 = arith.constant 0 : i32
    return %c0_i32, %1, %c0_i32_0 : i32, i32, i32
  }
  func.func @transform_2(%arg0: i32, %arg1: i32) -> (i32, i32, i32) {
    %c0_i32 = arith.constant 0 : i32
    %c0_i32_0 = arith.constant 0 : i32
    %c0_i32_1 = arith.constant 0 : i32
    return %arg0, %c0_i32, %c0_i32_0 : i32, i32, i32
  }
}

</mosaic_0001>

<llo_original>
// kernel: plane_geometry_forward.1
$region0: #{plane_geometry_forward.1}
  #allocation0 [shape = 'u32[]', space=smem, size = 0x4, offset = 0x4, fixed_abs, tag = 'smem constant byte address 0x4 - core index']
  #allocation1 [shape = 'u32[144,128]{1,0:T(1,128)}', space=vmem, size = 0x12000, scoped, tag = 'internal scratch']
  #allocation2 [shape = 'f32[8,128]{1,0:T(8,128)}', space=vmem, size = 0x1000, scoped, tag = 'scratch operand']
  %s0 = inlined_call_operand.vmem [shape: f32[8,14], index: 0, kind: input, shape index: {}]
  %s1 = inlined_call_operand.vmem [shape: f32[3,8,128], index: 1, kind: input, shape index: {}]
  %s2 = inlined_call_operand.vmem [shape: f32[1,8,128], index: 2, kind: output, shape index: {}]
  %s3 = sld [smem:[#allocation0]]
  $region38: #{plane_geometry_forward.1} parent=0
    _
  %s5 = ssub.s32 1, %s3
  %s6 = scalar_select 0, %s5, %s3
  $region1: #{plane_geometry_forward.1} parent=0
    #allocation3 [shape = 'u8[4096]{0}', space=smem, size = 0x1000, scoped, tag = 'input window, operand 0, single buffered']
    #allocation4 [shape = 's32[1]{0}', space=sflag, size = 0x4, scoped, tag = 'scoped memory for plane_geometry_forward.1']
    %7 = vsyncpa [#allocation4], 0
    // Predicated region
    $region2: #{plane_geometry_forward.1} parent=1 // pred_check
      _
    $region3: #{plane_geometry_forward.1} parent=1 // pred_check_branch
      %9 = sbr.rel (0) target = $region5
    $region4: #{plane_geometry_forward.1} parent=1 // pred_region
      %s11 = ssub.s32 128, 128
      %12 = vsyncadd [#allocation4], %s11
      %s14 = sshll.u32 %s0, 4
      %s15 = int_to_ptr.vmem [resolvable:$true] %s14
      %17 = dma.vmem_to_smem %s15, 128, [#allocation3], [#allocation4]
    $region5: #{plane_geometry_forward.1} parent=1 // pred_fallthru
      _
    // Predicated region
    $region6: #{plane_geometry_forward.1} parent=1 // pred_check
      _
    $region7: #{plane_geometry_forward.1} parent=1 // pred_check_branch
      %19 = sbr.rel (0) target = $region9
    $region8: #{plane_geometry_forward.1} parent=1 // pred_region
      %s20 = sadd.s32 0, 0
      %p21 = scmp.lt.s32.totalorder %s20, 0
      %s22 = scalar_select %p21, %s20, 0
      %s23 = smul.addr %s22, 8
      %s24 = scalar_lea.vmem %s1, %s23
      %s25 = sadd.s32 0, 0
    $region9: #{plane_geometry_forward.1} parent=1 // pred_fallthru
      _
    // Predicated region
    $region10: #{plane_geometry_forward.1} parent=1 // pred_check
      _
    $region11: #{plane_geometry_forward.1} parent=1 // pred_check_branch
      %27 = sbr.rel (0) target = $region13
    $region12: #{plane_geometry_forward.1} parent=1 // pred_region
      %28 = dma.done [#allocation4], 128
    $region13: #{plane_geometry_forward.1} parent=1 // pred_fallthru
      _
    %29 = sfence
    %s30 = sadd.s32 0, 0
    %p31 = scmp.lt.s32.totalorder %s30, 0
    %s32 = scalar_select %p31, %s30, 0
    %s33 = smul.addr %s32, 8
    %s34 = scalar_lea.vmem %s1, %s33
    %s35 = sadd.s32 0, 0
    %p36 = scmp.lt.s32.totalorder %s35, 0
    %s37 = scalar_select %p36, %s35, 0
    %s38 = smul.addr %s37, 8
    %s39 = scalar_lea.vmem %s1, %s38
    %s40 = sadd.s32 0, 0
    %s41 = sadd.s32 0, 0
    %p42 = scmp.eq.s32.totalorder 0, 0
    // Predicated region
    $region14: #{plane_geometry_forward.1} parent=1 // pred_check
      %p43 = pneg %p42
    $region15: #{plane_geometry_forward.1} parent=1 // pred_check_branch
      %45 = sbr.rel (%p43) target = $region17
    $region16: #{plane_geometry_forward.1} parent=1 // pred_region
      %46 = vst [vmem:[#allocation2] sm:$0xff] 0.0
    $region17: #{plane_geometry_forward.1} parent=1 // pred_fallthru
      _
    %s47 = sld [smem:[#allocation3]]
    %s48 = sld [smem:[#allocation3 + $0x1]]
    %s49 = sld [smem:[#allocation3 + $0x2]]
    %s50 = sld [smem:[#allocation3 + $0x3]]
    %s51 = sld [smem:[#allocation3 + $0x4]]
    %s52 = sld [smem:[#allocation3 + $0x5]]
    %s53 = sld [smem:[#allocation3 + $0x6]]
    %s54 = sld [smem:[#allocation3 + $0x7]]
    %s55 = sld [smem:[#allocation3 + $0x8]]
    %s56 = sld [smem:[#allocation3 + $0x9]]
    %s57 = sld [smem:[#allocation3 + $0xa]]
    %s58 = sld [smem:[#allocation3 + $0xb]]
    %s59 = sld [smem:[#allocation3 + $0xc]]
    %s60 = sld [smem:[#allocation3 + $0xd]]
    %s61 = sld [smem:[#allocation3 + $0x80]]
    %s62 = sld [smem:[#allocation3 + $0x81]]
    %s63 = sld [smem:[#allocation3 + $0x82]]
    %s64 = sld [smem:[#allocation3 + $0x83]]
    %s65 = sld [smem:[#allocation3 + $0x84]]
    %s66 = sld [smem:[#allocation3 + $0x85]]
    %s67 = sld [smem:[#allocation3 + $0x86]]
    %s68 = sld [smem:[#allocation3 + $0x87]]
    %s69 = sld [smem:[#allocation3 + $0x88]]
    %s70 = sld [smem:[#allocation3 + $0x89]]
    %s71 = sld [smem:[#allocation3 + $0x8a]]
    %s72 = sld [smem:[#allocation3 + $0x8b]]
    %s73 = sld [smem:[#allocation3 + $0x8c]]
    %s74 = sld [smem:[#allocation3 + $0x8d]]
    %s75 = sld [smem:[#allocation3 + $0x100]]
    %s76 = sld [smem:[#allocation3 + $0x101]]
    %s77 = sld [smem:[#allocation3 + $0x102]]
    %s78 = sld [smem:[#allocation3 + $0x103]]
    %s79 = sld [smem:[#allocation3 + $0x104]]
    %s80 = sld [smem:[#allocation3 + $0x105]]
    %s81 = sld [smem:[#allocation3 + $0x106]]
    %s82 = sld [smem:[#allocation3 + $0x107]]
    %s83 = sld [smem:[#allocation3 + $0x108]]
    %s84 = sld [smem:[#allocation3 + $0x109]]
    %s85 = sld [smem:[#allocation3 + $0x10a]]
    %s86 = sld [smem:[#allocation3 + $0x10b]]
    %s87 = sld [smem:[#allocation3 + $0x10c]]
    %s88 = sld [smem:[#allocation3 + $0x10d]]
    %s89 = sld [smem:[#allocation3 + $0x180]]
    %s90 = sld [smem:[#allocation3 + $0x181]]
    %s91 = sld [smem:[#allocation3 + $0x182]]
    %s92 = sld [smem:[#allocation3 + $0x183]]
    %s93 = sld [smem:[#allocation3 + $0x184]]
    %s94 = sld [smem:[#allocation3 + $0x185]]
    %s95 = sld [smem:[#allocation3 + $0x186]]
    %s96 = sld [smem:[#allocation3 + $0x187]]
    %s97 = sld [smem:[#allocation3 + $0x188]]
    %s98 = sld [smem:[#allocation3 + $0x189]]
    %s99 = sld [smem:[#allocation3 + $0x18a]]
    %s100 = sld [smem:[#allocation3 + $0x18b]]
    %s101 = sld [smem:[#allocation3 + $0x18c]]
    %s102 = sld [smem:[#allocation3 + $0x18d]]
    %s103 = sld [smem:[#allocation3 + $0x200]]
    %s104 = sld [smem:[#allocation3 + $0x201]]
    %s105 = sld [smem:[#allocation3 + $0x202]]
    %s106 = sld [smem:[#allocation3 + $0x203]]
    %s107 = sld [smem:[#allocation3 + $0x204]]
    %s108 = sld [smem:[#allocation3 + $0x205]]
    %s109 = sld [smem:[#allocation3 + $0x206]]
    %s110 = sld [smem:[#allocation3 + $0x207]]
    %s111 = sld [smem:[#allocation3 + $0x208]]
    %s112 = sld [smem:[#allocation3 + $0x209]]
    %s113 = sld [smem:[#allocation3 + $0x20a]]
    %s114 = sld [smem:[#allocation3 + $0x20b]]
    %s115 = sld [smem:[#allocation3 + $0x20c]]
    %s116 = sld [smem:[#allocation3 + $0x20d]]
    %s117 = sld [smem:[#allocation3 + $0x280]]
    %s118 = sld [smem:[#allocation3 + $0x281]]
    %s119 = sld [smem:[#allocation3 + $0x282]]
    %s120 = sld [smem:[#allocation3 + $0x283]]
    %s121 = sld [smem:[#allocation3 + $0x284]]
    %s122 = sld [smem:[#allocation3 + $0x285]]
    %s123 = sld [smem:[#allocation3 + $0x286]]
    %s124 = sld [smem:[#allocation3 + $0x287]]
    %s125 = sld [smem:[#allocation3 + $0x288]]
    %s126 = sld [smem:[#allocation3 + $0x289]]
    %s127 = sld [smem:[#allocation3 + $0x28a]]
    %s128 = sld [smem:[#allocation3 + $0x28b]]
    %s129 = sld [smem:[#allocation3 + $0x28c]]
    %s130 = sld [smem:[#allocation3 + $0x28d]]
    %s131 = sld [smem:[#allocation3 + $0x300]]
    %s132 = sld [smem:[#allocation3 + $0x301]]
    %s133 = sld [smem:[#allocation3 + $0x302]]
    %s134 = sld [smem:[#allocation3 + $0x303]]
    %s135 = sld [smem:[#allocation3 + $0x304]]
    %s136 = sld [smem:[#allocation3 + $0x305]]
    %s137 = sld [smem:[#allocation3 + $0x306]]
    %s138 = sld [smem:[#allocation3 + $0x307]]
    %s139 = sld [smem:[#allocation3 + $0x308]]
    %s140 = sld [smem:[#allocation3 + $0x309]]
    %s141 = sld [smem:[#allocation3 + $0x30a]]
    %s142 = sld [smem:[#allocation3 + $0x30b]]
    %s143 = sld [smem:[#allocation3 + $0x30c]]
    %s144 = sld [smem:[#allocation3 + $0x30d]]
    %s145 = sld [smem:[#allocation3 + $0x380]]
    %s146 = sld [smem:[#allocation3 + $0x381]]
    %s147 = sld [smem:[#allocation3 + $0x382]]
    %s148 = sld [smem:[#allocation3 + $0x383]]
    %s149 = sld [smem:[#allocation3 + $0x384]]
    %s150 = sld [smem:[#allocation3 + $0x385]]
    %s151 = sld [smem:[#allocation3 + $0x386]]
    %s152 = sld [smem:[#allocation3 + $0x387]]
    %s153 = sld [smem:[#allocation3 + $0x388]]
    %s154 = sld [smem:[#allocation3 + $0x389]]
    %s155 = sld [smem:[#allocation3 + $0x38a]]
    %s156 = sld [smem:[#allocation3 + $0x38b]]
    %s157 = sld [smem:[#allocation3 + $0x38c]]
    %s158 = sld [smem:[#allocation3 + $0x38d]]
    %p159 = scmp.lt.s32.totalorder %s41, 0
    // Predicated region
    $region18: #{plane_geometry_forward.1} parent=1 // pred_check
      %p160 = pneg %p159
    $region19: #{plane_geometry_forward.1} parent=1 // pred_check_branch
      %162 = sbr.rel (%p160) target = $region21
    $region20: #{plane_geometry_forward.1} parent=1 // pred_region
      %v163 = vld [vmem:[%s39] sm:$0xff]
      %s164 = sadd.s32 0, 8
      %s165 = scalar_lea.vmem %s39, %s164
      %v166 = vld [vmem:[%s165] sm:$0xff]
      %s167 = sadd.s32 0, 16
      %s168 = scalar_lea.vmem %s39, %s167
      %v169 = vld [vmem:[%s168] sm:$0xff]
      %v170 = vstv %s47
      %v171 = vmul.f32 %v163, %v170
      %v172 = vstv %s48
      %v173 = vmul.f32 %v166, %v172
      %v174 = vadd.f32 %v171, %v173
      %v175 = vstv %s49
      %v176 = vmul.f32 %v169, %v175
      %v177 = vadd.f32 %v174, %v176
      %v178 = vstv %s56
      %v179 = vsub.f32 %v177, %v178
      %v180 = vstv %s50
      %v181 = vmul.f32 %v163, %v180
      %v182 = vstv %s51
      %v183 = vmul.f32 %v166, %v182
      %v184 = vadd.f32 %v181, %v183
      %v185 = vstv %s52
      %v186 = vmul.f32 %v169, %v185
      %v187 = vadd.f32 %v184, %v186
      %v188 = vstv %s57
      %v189 = vsub.f32 %v187, %v188
      %v190 = vstv %s53
      %v191 = vmul.f32 %v163, %v190
      %v192 = vstv %s54
      %v193 = vmul.f32 %v166, %v192
      %v194 = vadd.f32 %v191, %v193
      %v195 = vstv %s55
      %v196 = vmul.f32 %v169, %v195
      %v197 = vadd.f32 %v194, %v196
      %v198 = vstv %s58
      %v199 = vsub.f32 %v197, %v198
      %v200 = vand.u32 2147483647, %v179
      %v201 = vstv %s59
      %v202 = vsub.f32 %v200, %v201
      %v203 = vmax.f32 %v202, 0.0
      %v204 = vand.u32 2147483647, %v189
      %v205 = vstv %s60
      %v206 = vsub.f32 %v204, %v205
      %v207 = vmax.f32 %v206, 0.0
      %v208 = vmul.f32 %v203, %v203
      %v209 = vmul.f32 %v207, %v207
      %v210 = vadd.f32 %v208, %v209
      %v211 = vmul.f32 %v199, %v199
      %v212 = vadd.f32 %v210, %v211
      %v213 = vstv %s61
      %v214 = vmul.f32 %v163, %v213
      %v215 = vstv %s62
      %v216 = vmul.f32 %v166, %v215
      %v217 = vadd.f32 %v214, %v216
      %v218 = vstv %s63
      %v219 = vmul.f32 %v169, %v218
      %v220 = vadd.f32 %v217, %v219
      %v221 = vstv %s70
      %v222 = vsub.f32 %v220, %v221
      %v223 = vstv %s64
      %v224 = vmul.f32 %v163, %v223
      %v225 = vstv %s65
      %v226 = vmul.f32 %v166, %v225
      %v227 = vadd.f32 %v224, %v226
      %v228 = vstv %s66
      %v229 = vmul.f32 %v169, %v228
      %v230 = vadd.f32 %v227, %v229
      %v231 = vstv %s71
      %v232 = vsub.f32 %v230, %v231
      %v233 = vstv %s67
      %v234 = vmul.f32 %v163, %v233
      %v235 = vstv %s68
      %v236 = vmul.f32 %v166, %v235
      %v237 = vadd.f32 %v234, %v236
      %v238 = vstv %s69
      %v239 = vmul.f32 %v169, %v238
      %v240 = vadd.f32 %v237, %v239
      %v241 = vstv %s72
      %v242 = vsub.f32 %v240, %v241
      %v243 = vand.u32 2147483647, %v222
      %v244 = vstv %s73
      %v245 = vsub.f32 %v243, %v244
      %v246 = vmax.f32 %v245, 0.0
      %v247 = vand.u32 2147483647, %v232
      %v248 = vstv %s74
      %v249 = vsub.f32 %v247, %v248
      %v250 = vmax.f32 %v249, 0.0
      %v251 = vmul.f32 %v246, %v246
      %v252 = vmul.f32 %v250, %v250
      %v253 = vadd.f32 %v251, %v252
      %v254 = vmul.f32 %v242, %v242
      %v255 = vadd.f32 %v253, %v254
      %v256 = vmin.f32 %v212, %v255
      %v257 = vstv %s75
      %v258 = vmul.f32 %v163, %v257
      %v259 = vstv %s76
      %v260 = vmul.f32 %v166, %v259
      %v261 = vadd.f32 %v258, %v260
      %v262 = vstv %s77
      %v263 = vmul.f32 %v169, %v262
      %v264 = vadd.f32 %v261, %v263
      %v265 = vstv %s84
      %v266 = vsub.f32 %v264, %v265
      %v267 = vstv %s78
      %v268 = vmul.f32 %v163, %v267
      %v269 = vstv %s79
      %v270 = vmul.f32 %v166, %v269
      %v271 = vadd.f32 %v268, %v270
      %v272 = vstv %s80
      %v273 = vmul.f32 %v169, %v272
      %v274 = vadd.f32 %v271, %v273
      %v275 = vstv %s85
      %v276 = vsub.f32 %v274, %v275
      %v277 = vstv %s81
      %v278 = vmul.f32 %v163, %v277
      %v279 = vstv %s82
      %v280 = vmul.f32 %v166, %v279
      %v281 = vadd.f32 %v278, %v280
      %v282 = vstv %s83
      %v283 = vmul.f32 %v169, %v282
      %v284 = vadd.f32 %v281, %v283
      %v285 = vstv %s86
      %v286 = vsub.f32 %v284, %v285
      %v287 = vand.u32 2147483647, %v266
      %v288 = vstv %s87
      %v289 = vsub.f32 %v287, %v288
      %v290 = vmax.f32 %v289, 0.0
      %v291 = vand.u32 2147483647, %v276
      %v292 = vstv %s88
      %v293 = vsub.f32 %v291, %v292
      %v294 = vmax.f32 %v293, 0.0
      %v295 = vmul.f32 %v290, %v290
      %v296 = vmul.f32 %v294, %v294
      %v297 = vadd.f32 %v295, %v296
      %v298 = vmul.f32 %v286, %v286
      %v299 = vadd.f32 %v297, %v298
      %v300 = vmin.f32 %v256, %v299
      %v301 = vstv %s89
      %v302 = vmul.f32 %v163, %v301
      %v303 = vstv %s90
      %v304 = vmul.f32 %v166, %v303
      %v305 = vadd.f32 %v302, %v304
      %v306 = vstv %s91
      %v307 = vmul.f32 %v169, %v306
      %v308 = vadd.f32 %v305, %v307
      %v309 = vstv %s98
      %v310 = vsub.f32 %v308, %v309
      %v311 = vstv %s92
      %v312 = vmul.f32 %v163, %v311
      %v313 = vstv %s93
      %v314 = vmul.f32 %v166, %v313
      %v315 = vadd.f32 %v312, %v314
      %v316 = vstv %s94
      %v317 = vmul.f32 %v169, %v316
      %v318 = vadd.f32 %v315, %v317
      %v319 = vstv %s99
      %v320 = vsub.f32 %v318, %v319
      %v321 = vstv %s95
      %v322 = vmul.f32 %v163, %v321
      %v323 = vstv %s96
      %v324 = vmul.f32 %v166, %v323
      %v325 = vadd.f32 %v322, %v324
      %v326 = vstv %s97
      %v327 = vmul.f32 %v169, %v326
      %v328 = vadd.f32 %v325, %v327
      %v329 = vstv %s100
      %v330 = vsub.f32 %v328, %v329
      %v331 = vand.u32 2147483647, %v310
      %v332 = vstv %s101
      %v333 = vsub.f32 %v331, %v332
      %v334 = vmax.f32 %v333, 0.0
      %v335 = vand.u32 2147483647, %v320
      %v336 = vstv %s102
      %v337 = vsub.f32 %v335, %v336
      %v338 = vmax.f32 %v337, 0.0
      %v339 = vmul.f32 %v334, %v334
      %v340 = vmul.f32 %v338, %v338
      %v341 = vadd.f32 %v339, %v340
      %v342 = vmul.f32 %v330, %v330
      %v343 = vadd.f32 %v341, %v342
      %v344 = vmin.f32 %v300, %v343
      %v345 = vstv %s103
      %v346 = vmul.f32 %v163, %v345
      %v347 = vstv %s104
      %v348 = vmul.f32 %v166, %v347
      %v349 = vadd.f32 %v346, %v348
      %v350 = vstv %s105
      %v351 = vmul.f32 %v169, %v350
      %v352 = vadd.f32 %v349, %v351
      %v353 = vstv %s112
      %v354 = vsub.f32 %v352, %v353
      %v355 = vstv %s106
      %v356 = vmul.f32 %v163, %v355
      %v357 = vstv %s107
      %v358 = vmul.f32 %v166, %v357
      %v359 = vadd.f32 %v356, %v358
      %v360 = vstv %s108
      %v361 = vmul.f32 %v169, %v360
      %v362 = vadd.f32 %v359, %v361
      %v363 = vstv %s113
      %v364 = vsub.f32 %v362, %v363
      %v365 = vstv %s109
      %v366 = vmul.f32 %v163, %v365
      %v367 = vstv %s110
      %v368 = vmul.f32 %v166, %v367
      %v369 = vadd.f32 %v366, %v368
      %v370 = vstv %s111
      %v371 = vmul.f32 %v169, %v370
      %v372 = vadd.f32 %v369, %v371
      %v373 = vstv %s114
      %v374 = vsub.f32 %v372, %v373
      %v375 = vand.u32 2147483647, %v354
      %v376 = vstv %s115
      %v377 = vsub.f32 %v375, %v376
      %v378 = vmax.f32 %v377, 0.0
      %v379 = vand.u32 2147483647, %v364
      %v380 = vstv %s116
      %v381 = vsub.f32 %v379, %v380
      %v382 = vmax.f32 %v381, 0.0
      %v383 = vmul.f32 %v378, %v378
      %v384 = vmul.f32 %v382, %v382
      %v385 = vadd.f32 %v383, %v384
      %v386 = vmul.f32 %v374, %v374
      %v387 = vadd.f32 %v385, %v386
      %v388 = vmin.f32 %v344, %v387
      %v389 = vstv %s117
      %v390 = vmul.f32 %v163, %v389
      %v391 = vstv %s118
      %v392 = vmul.f32 %v166, %v391
      %v393 = vadd.f32 %v390, %v392
      %v394 = vstv %s119
      %v395 = vmul.f32 %v169, %v394
      %v396 = vadd.f32 %v393, %v395
      %v397 = vstv %s126
      %v398 = vsub.f32 %v396, %v397
      %v399 = vstv %s120
      %v400 = vmul.f32 %v163, %v399
      %v401 = vstv %s121
      %v402 = vmul.f32 %v166, %v401
      %v403 = vadd.f32 %v400, %v402
      %v404 = vstv %s122
      %v405 = vmul.f32 %v169, %v404
      %v406 = vadd.f32 %v403, %v405
      %v407 = vstv %s127
      %v408 = vsub.f32 %v406, %v407
      %v409 = vstv %s123
      %v410 = vmul.f32 %v163, %v409
      %v411 = vstv %s124
      %v412 = vmul.f32 %v166, %v411
      %v413 = vadd.f32 %v410, %v412
      %v414 = vstv %s125
      %v415 = vmul.f32 %v169, %v414
      %v416 = vadd.f32 %v413, %v415
      %v417 = vstv %s128
      %v418 = vsub.f32 %v416, %v417
      %v419 = vand.u32 2147483647, %v398
      %v420 = vstv %s129
      %v421 = vsub.f32 %v419, %v420
      %v422 = vmax.f32 %v421, 0.0
      %v423 = vand.u32 2147483647, %v408
      %v424 = vstv %s130
      %v425 = vsub.f32 %v423, %v424
      %v426 = vmax.f32 %v425, 0.0
      %v427 = vmul.f32 %v422, %v422
      %v428 = vmul.f32 %v426, %v426
      %v429 = vadd.f32 %v427, %v428
      %v430 = vmul.f32 %v418, %v418
      %v431 = vadd.f32 %v429, %v430
      %v432 = vmin.f32 %v388, %v431
      %v433 = vstv %s131
      %v434 = vmul.f32 %v163, %v433
      %v435 = vstv %s132
      %v436 = vmul.f32 %v166, %v435
      %v437 = vadd.f32 %v434, %v436
      %v438 = vstv %s133
      %v439 = vmul.f32 %v169, %v438
      %v440 = vadd.f32 %v437, %v439
      %v441 = vstv %s140
      %v442 = vsub.f32 %v440, %v441
      %v443 = vstv %s134
      %v444 = vmul.f32 %v163, %v443
      %v445 = vstv %s135
      %v446 = vmul.f32 %v166, %v445
      %v447 = vadd.f32 %v444, %v446
      %v448 = vstv %s136
      %v449 = vmul.f32 %v169, %v448
      %v450 = vadd.f32 %v447, %v449
      %v451 = vstv %s141
      %v452 = vsub.f32 %v450, %v451
      %v453 = vstv %s137
      %v454 = vmul.f32 %v163, %v453
      %v455 = vstv %s138
      %v456 = vmul.f32 %v166, %v455
      %v457 = vadd.f32 %v454, %v456
      %v458 = vstv %s139
      %v459 = vmul.f32 %v169, %v458
      %v460 = vadd.f32 %v457, %v459
      %v461 = vstv %s142
      %v462 = vsub.f32 %v460, %v461
      %v463 = vand.u32 2147483647, %v442
      %v464 = vstv %s143
      %v465 = vsub.f32 %v463, %v464
      %v466 = vmax.f32 %v465, 0.0
      %v467 = vand.u32 2147483647, %v452
      %v468 = vstv %s144
      %v469 = vsub.f32 %v467, %v468
      %v470 = vmax.f32 %v469, 0.0
      %v471 = vmul.f32 %v466, %v466
      %v472 = vmul.f32 %v470, %v470
      %v473 = vadd.f32 %v471, %v472
      %v474 = vmul.f32 %v462, %v462
      %v475 = vadd.f32 %v473, %v474
      %v476 = vmin.f32 %v432, %v475
      %v477 = vstv %s145
      %v478 = vmul.f32 %v163, %v477
      %v479 = vstv %s146
      %v480 = vmul.f32 %v166, %v479
      %v481 = vadd.f32 %v478, %v480
      %v482 = vstv %s147
      %v483 = vmul.f32 %v169, %v482
      %v484 = vadd.f32 %v481, %v483
      %v485 = vstv %s154
      %v486 = vsub.f32 %v484, %v485
      %v487 = vstv %s148
      %v488 = vmul.f32 %v163, %v487
      %v489 = vstv %s149
      %v490 = vmul.f32 %v166, %v489
      %v491 = vadd.f32 %v488, %v490
      %v492 = vstv %s150
      %v493 = vmul.f32 %v169, %v492
      %v494 = vadd.f32 %v491, %v493
      %v495 = vstv %s155
      %v496 = vsub.f32 %v494, %v495
      %v497 = vstv %s151
      %v498 = vmul.f32 %v163, %v497
      %v499 = vstv %s152
      %v500 = vmul.f32 %v166, %v499
      %v501 = vadd.f32 %v498, %v500
      %v502 = vstv %s153
      %v503 = vmul.f32 %v169, %v502
      %v504 = vadd.f32 %v501, %v503
      %v505 = vstv %s156
      %v506 = vsub.f32 %v504, %v505
      %v507 = vand.u32 2147483647, %v486
      %v508 = vstv %s157
      %v509 = vsub.f32 %v507, %v508
      %v510 = vmax.f32 %v509, 0.0
      %v511 = vand.u32 2147483647, %v496
      %v512 = vstv %s158
      %v513 = vsub.f32 %v511, %v512
      %v514 = vmax.f32 %v513, 0.0
      %v515 = vmul.f32 %v510, %v510
      %v516 = vmul.f32 %v514, %v514
      %v517 = vadd.f32 %v515, %v516
      %v518 = vmul.f32 %v506, %v506
      %v519 = vadd.f32 %v517, %v518
      %v520 = vmin.f32 %v476, %v519
      %v521 = vadd.f32 %v520, 0.0
      %v522 = vld [vmem:[#allocation2] sm:$0xff]
      %v523 = vadd.f32 %v522, %v521
      %524 = vst [vmem:[#allocation2] sm:$0xff] %v523
    $region21: #{plane_geometry_forward.1} parent=1 // pred_fallthru
      _
    %p525 = scmp.ge.s32.totalorder %s41, 0
    // Predicated region
    $region22: #{plane_geometry_forward.1} parent=1 // pred_check
      %p526 = pneg %p525
    $region23: #{plane_geometry_forward.1} parent=1 // pred_check_branch
      %528 = sbr.rel (%p526) target = $region25
    $region24: #{plane_geometry_forward.1} parent=1 // pred_region
      %v529 = vld [vmem:[%s39] sm:$0xff]
      %s530 = sadd.s32 0, 8
      %s531 = scalar_lea.vmem %s39, %s530
      %v532 = vld [vmem:[%s531] sm:$0xff]
      %s533 = sadd.s32 0, 16
      %s534 = scalar_lea.vmem %s39, %s533
      %v535 = vld [vmem:[%s534] sm:$0xff]
      %v536 = vstv %s47
      %v537 = vmul.f32 %v529, %v536
      %v538 = vstv %s48
      %v539 = vmul.f32 %v532, %v538
      %v540 = vadd.f32 %v537, %v539
      %v541 = vstv %s49
      %v542 = vmul.f32 %v535, %v541
      %v543 = vadd.f32 %v540, %v542
      %v544 = vstv %s56
      %v545 = vsub.f32 %v543, %v544
      %v546 = vstv %s50
      %v547 = vmul.f32 %v529, %v546
      %v548 = vstv %s51
      %v549 = vmul.f32 %v532, %v548
      %v550 = vadd.f32 %v547, %v549
      %v551 = vstv %s52
      %v552 = vmul.f32 %v535, %v551
      %v553 = vadd.f32 %v550, %v552
      %v554 = vstv %s57
      %v555 = vsub.f32 %v553, %v554
      %v556 = vstv %s53
      %v557 = vmul.f32 %v529, %v556
      %v558 = vstv %s54
      %v559 = vmul.f32 %v532, %v558
      %v560 = vadd.f32 %v557, %v559
      %v561 = vstv %s55
      %v562 = vmul.f32 %v535, %v561
      %v563 = vadd.f32 %v560, %v562
      %v564 = vstv %s58
      %v565 = vsub.f32 %v563, %v564
      %v566 = vand.u32 2147483647, %v545
      %v567 = vstv %s59
      %v568 = vsub.f32 %v566, %v567
      %v569 = vmax.f32 %v568, 0.0
      %v570 = vand.u32 2147483647, %v555
      %v571 = vstv %s60
      %v572 = vsub.f32 %v570, %v571
      %v573 = vmax.f32 %v572, 0.0
      %v574 = vmul.f32 %v569, %v569
      %v575 = vmul.f32 %v573, %v573
      %v576 = vadd.f32 %v574, %v575
      %v577 = vmul.f32 %v565, %v565
      %v578 = vadd.f32 %v576, %v577
      %v579 = vstv %s61
      %v580 = vmul.f32 %v529, %v579
      %v581 = vstv %s62
      %v582 = vmul.f32 %v532, %v581
      %v583 = vadd.f32 %v580, %v582
      %v584 = vstv %s63
      %v585 = vmul.f32 %v535, %v584
      %v586 = vadd.f32 %v583, %v585
      %v587 = vstv %s70
      %v588 = vsub.f32 %v586, %v587
      %v589 = vstv %s64
      %v590 = vmul.f32 %v529, %v589
      %v591 = vstv %s65
      %v592 = vmul.f32 %v532, %v591
      %v593 = vadd.f32 %v590, %v592
      %v594 = vstv %s66
      %v595 = vmul.f32 %v535, %v594
      %v596 = vadd.f32 %v593, %v595
      %v597 = vstv %s71
      %v598 = vsub.f32 %v596, %v597
      %v599 = vstv %s67
      %v600 = vmul.f32 %v529, %v599
      %v601 = vstv %s68
      %v602 = vmul.f32 %v532, %v601
      %v603 = vadd.f32 %v600, %v602
      %v604 = vstv %s69
      %v605 = vmul.f32 %v535, %v604
      %v606 = vadd.f32 %v603, %v605
      %v607 = vstv %s72
      %v608 = vsub.f32 %v606, %v607
      %v609 = vand.u32 2147483647, %v588
      %v610 = vstv %s73
      %v611 = vsub.f32 %v609, %v610
      %v612 = vmax.f32 %v611, 0.0
      %v613 = vand.u32 2147483647, %v598
      %v614 = vstv %s74
      %v615 = vsub.f32 %v613, %v614
      %v616 = vmax.f32 %v615, 0.0
      %v617 = vmul.f32 %v612, %v612
      %v618 = vmul.f32 %v616, %v616
      %v619 = vadd.f32 %v617, %v618
      %v620 = vmul.f32 %v608, %v608
      %v621 = vadd.f32 %v619, %v620
      %v622 = vmin.f32 %v578, %v621
      %v623 = vstv %s75
      %v624 = vmul.f32 %v529, %v623
      %v625 = vstv %s76
      %v626 = vmul.f32 %v532, %v625
      %v627 = vadd.f32 %v624, %v626
      %v628 = vstv %s77
      %v629 = vmul.f32 %v535, %v628
      %v630 = vadd.f32 %v627, %v629
      %v631 = vstv %s84
      %v632 = vsub.f32 %v630, %v631
      %v633 = vstv %s78
      %v634 = vmul.f32 %v529, %v633
      %v635 = vstv %s79
      %v636 = vmul.f32 %v532, %v635
      %v637 = vadd.f32 %v634, %v636
      %v638 = vstv %s80
      %v639 = vmul.f32 %v535, %v638
      %v640 = vadd.f32 %v637, %v639
      %v641 = vstv %s85
      %v642 = vsub.f32 %v640, %v641
      %v643 = vstv %s81
      %v644 = vmul.f32 %v529, %v643
      %v645 = vstv %s82
      %v646 = vmul.f32 %v532, %v645
      %v647 = vadd.f32 %v644, %v646
      %v648 = vstv %s83
      %v649 = vmul.f32 %v535, %v648
      %v650 = vadd.f32 %v647, %v649
      %v651 = vstv %s86
      %v652 = vsub.f32 %v650, %v651
      %v653 = vand.u32 2147483647, %v632
      %v654 = vstv %s87
      %v655 = vsub.f32 %v653, %v654
      %v656 = vmax.f32 %v655, 0.0
      %v657 = vand.u32 2147483647, %v642
      %v658 = vstv %s88
      %v659 = vsub.f32 %v657, %v658
      %v660 = vmax.f32 %v659, 0.0
      %v661 = vmul.f32 %v656, %v656
      %v662 = vmul.f32 %v660, %v660
      %v663 = vadd.f32 %v661, %v662
      %v664 = vmul.f32 %v652, %v652
      %v665 = vadd.f32 %v663, %v664
      %v666 = vmin.f32 %v622, %v665
      %v667 = vstv %s89
      %v668 = vmul.f32 %v529, %v667
      %v669 = vstv %s90
      %v670 = vmul.f32 %v532, %v669
      %v671 = vadd.f32 %v668, %v670
      %v672 = vstv %s91
      %v673 = vmul.f32 %v535, %v672
      %v674 = vadd.f32 %v671, %v673
      %v675 = vstv %s98
      %v676 = vsub.f32 %v674, %v675
      %v677 = vstv %s92
      %v678 = vmul.f32 %v529, %v677
      %v679 = vstv %s93
      %v680 = vmul.f32 %v532, %v679
      %v681 = vadd.f32 %v678, %v680
      %v682 = vstv %s94
      %v683 = vmul.f32 %v535, %v682
      %v684 = vadd.f32 %v681, %v683
      %v685 = vstv %s99
      %v686 = vsub.f32 %v684, %v685
      %v687 = vstv %s95
      %v688 = vmul.f32 %v529, %v687
      %v689 = vstv %s96
      %v690 = vmul.f32 %v532, %v689
      %v691 = vadd.f32 %v688, %v690
      %v692 = vstv %s97
      %v693 = vmul.f32 %v535, %v692
      %v694 = vadd.f32 %v691, %v693
      %v695 = vstv %s100
      %v696 = vsub.f32 %v694, %v695
      %v697 = vand.u32 2147483647, %v676
      %v698 = vstv %s101
      %v699 = vsub.f32 %v697, %v698
      %v700 = vmax.f32 %v699, 0.0
      %v701 = vand.u32 2147483647, %v686
      %v702 = vstv %s102
      %v703 = vsub.f32 %v701, %v702
      %v704 = vmax.f32 %v703, 0.0
      %v705 = vmul.f32 %v700, %v700
      %v706 = vmul.f32 %v704, %v704
      %v707 = vadd.f32 %v705, %v706
      %v708 = vmul.f32 %v696, %v696
      %v709 = vadd.f32 %v707, %v708
      %v710 = vmin.f32 %v666, %v709
      %v711 = vstv %s103
      %v712 = vmul.f32 %v529, %v711
      %v713 = vstv %s104
      %v714 = vmul.f32 %v532, %v713
      %v715 = vadd.f32 %v712, %v714
      %v716 = vstv %s105
      %v717 = vmul.f32 %v535, %v716
      %v718 = vadd.f32 %v715, %v717
      %v719 = vstv %s112
      %v720 = vsub.f32 %v718, %v719
      %v721 = vstv %s106
      %v722 = vmul.f32 %v529, %v721
      %v723 = vstv %s107
      %v724 = vmul.f32 %v532, %v723
      %v725 = vadd.f32 %v722, %v724
      %v726 = vstv %s108
      %v727 = vmul.f32 %v535, %v726
      %v728 = vadd.f32 %v725, %v727
      %v729 = vstv %s113
      %v730 = vsub.f32 %v728, %v729
      %v731 = vstv %s109
      %v732 = vmul.f32 %v529, %v731
      %v733 = vstv %s110
      %v734 = vmul.f32 %v532, %v733
      %v735 = vadd.f32 %v732, %v734
      %v736 = vstv %s111
      %v737 = vmul.f32 %v535, %v736
      %v738 = vadd.f32 %v735, %v737
      %v739 = vstv %s114
      %v740 = vsub.f32 %v738, %v739
      %v741 = vand.u32 2147483647, %v720
      %v742 = vstv %s115
      %v743 = vsub.f32 %v741, %v742
      %v744 = vmax.f32 %v743, 0.0
      %v745 = vand.u32 2147483647, %v730
      %v746 = vstv %s116
      %v747 = vsub.f32 %v745, %v746
      %v748 = vmax.f32 %v747, 0.0
      %v749 = vmul.f32 %v744, %v744
      %v750 = vmul.f32 %v748, %v748
      %v751 = vadd.f32 %v749, %v750
      %v752 = vmul.f32 %v740, %v740
      %v753 = vadd.f32 %v751, %v752
      %v754 = vmin.f32 %v710, %v753
      %v755 = vstv %s117
      %v756 = vmul.f32 %v529, %v755
      %v757 = vstv %s118
      %v758 = vmul.f32 %v532, %v757
      %v759 = vadd.f32 %v756, %v758
      %v760 = vstv %s119
      %v761 = vmul.f32 %v535, %v760
      %v762 = vadd.f32 %v759, %v761
      %v763 = vstv %s126
      %v764 = vsub.f32 %v762, %v763
      %v765 = vstv %s120
      %v766 = vmul.f32 %v529, %v765
      %v767 = vstv %s121
      %v768 = vmul.f32 %v532, %v767
      %v769 = vadd.f32 %v766, %v768
      %v770 = vstv %s122
      %v771 = vmul.f32 %v535, %v770
      %v772 = vadd.f32 %v769, %v771
      %v773 = vstv %s127
      %v774 = vsub.f32 %v772, %v773
      %v775 = vstv %s123
      %v776 = vmul.f32 %v529, %v775
      %v777 = vstv %s124
      %v778 = vmul.f32 %v532, %v777
      %v779 = vadd.f32 %v776, %v778
      %v780 = vstv %s125
      %v781 = vmul.f32 %v535, %v780
      %v782 = vadd.f32 %v779, %v781
      %v783 = vstv %s128
      %v784 = vsub.f32 %v782, %v783
      %v785 = vand.u32 2147483647, %v764
      %v786 = vstv %s129
      %v787 = vsub.f32 %v785, %v786
      %v788 = vmax.f32 %v787, 0.0
      %v789 = vand.u32 2147483647, %v774
      %v790 = vstv %s130
      %v791 = vsub.f32 %v789, %v790
      %v792 = vmax.f32 %v791, 0.0
      %v793 = vmul.f32 %v788, %v788
      %v794 = vmul.f32 %v792, %v792
      %v795 = vadd.f32 %v793, %v794
      %v796 = vmul.f32 %v784, %v784
      %v797 = vadd.f32 %v795, %v796
      %v798 = vmin.f32 %v754, %v797
      %v799 = vstv %s131
      %v800 = vmul.f32 %v529, %v799
      %v801 = vstv %s132
      %v802 = vmul.f32 %v532, %v801
      %v803 = vadd.f32 %v800, %v802
      %v804 = vstv %s133
      %v805 = vmul.f32 %v535, %v804
      %v806 = vadd.f32 %v803, %v805
      %v807 = vstv %s140
      %v808 = vsub.f32 %v806, %v807
      %v809 = vstv %s134
      %v810 = vmul.f32 %v529, %v809
      %v811 = vstv %s135
      %v812 = vmul.f32 %v532, %v811
      %v813 = vadd.f32 %v810, %v812
      %v814 = vstv %s136
      %v815 = vmul.f32 %v535, %v814
      %v816 = vadd.f32 %v813, %v815
      %v817 = vstv %s141
      %v818 = vsub.f32 %v816, %v817
      %v819 = vstv %s137
      %v820 = vmul.f32 %v529, %v819
      %v821 = vstv %s138
      %v822 = vmul.f32 %v532, %v821
      %v823 = vadd.f32 %v820, %v822
      %v824 = vstv %s139
      %v825 = vmul.f32 %v535, %v824
      %v826 = vadd.f32 %v823, %v825
      %v827 = vstv %s142
      %v828 = vsub.f32 %v826, %v827
      %v829 = vand.u32 2147483647, %v808
      %v830 = vstv %s143
      %v831 = vsub.f32 %v829, %v830
      %v832 = vmax.f32 %v831, 0.0
      %v833 = vand.u32 2147483647, %v818
      %v834 = vstv %s144
      %v835 = vsub.f32 %v833, %v834
      %v836 = vmax.f32 %v835, 0.0
      %v837 = vmul.f32 %v832, %v832
      %v838 = vmul.f32 %v836, %v836
      %v839 = vadd.f32 %v837, %v838
      %v840 = vmul.f32 %v828, %v828
      %v841 = vadd.f32 %v839, %v840
      %v842 = vmin.f32 %v798, %v841
      %v843 = vstv %s145
      %v844 = vmul.f32 %v529, %v843
      %v845 = vstv %s146
      %v846 = vmul.f32 %v532, %v845
      %v847 = vadd.f32 %v844, %v846
      %v848 = vstv %s147
      %v849 = vmul.f32 %v535, %v848
      %v850 = vadd.f32 %v847, %v849
      %v851 = vstv %s154
      %v852 = vsub.f32 %v850, %v851
      %v853 = vstv %s148
      %v854 = vmul.f32 %v529, %v853
      %v855 = vstv %s149
      %v856 = vmul.f32 %v532, %v855
      %v857 = vadd.f32 %v854, %v856
      %v858 = vstv %s150
      %v859 = vmul.f32 %v535, %v858
      %v860 = vadd.f32 %v857, %v859
      %v861 = vstv %s155
      %v862 = vsub.f32 %v860, %v861
      %v863 = vstv %s151
      %v864 = vmul.f32 %v529, %v863
      %v865 = vstv %s152
      %v866 = vmul.f32 %v532, %v865
      %v867 = vadd.f32 %v864, %v866
      %v868 = vstv %s153
      %v869 = vmul.f32 %v535, %v868
      %v870 = vadd.f32 %v867, %v869
      %v871 = vstv %s156
      %v872 = vsub.f32 %v870, %v871
      %v873 = vand.u32 2147483647, %v852
      %v874 = vstv %s157
      %v875 = vsub.f32 %v873, %v874
      %v876 = vmax.f32 %v875, 0.0
      %v877 = vand.u32 2147483647, %v862
      %v878 = vstv %s158
      %v879 = vsub.f32 %v877, %v878
      %v880 = vmax.f32 %v879, 0.0
      %v881 = vmul.f32 %v876, %v876
      %v882 = vmul.f32 %v880, %v880
      %v883 = vadd.f32 %v881, %v882
      %v884 = vmul.f32 %v872, %v872
      %v885 = vadd.f32 %v883, %v884
      %v886 = vmin.f32 %v842, %v885
      %v887 = vlaneseq
      %v888 = vshrl.u32 %v887, 7
      %v889 = vlaneseq
      %v890 = vand.u32 %v889, 127
      %s891 = smul.u32 %s41, 1024
      %v892 = vstv 0
      %v893 = vadd.s32 %v892, %v888
      %v894 = vmul.u32 %v893, 128
      %v895 = vstv %s891
      %v896 = vadd.s32 %v895, %v894
      %v897 = vadd.s32 %v896, %v890
      %vm898 = vcmp.lt.s32.totalorder %v897, 500
      %v899 = vsel %vm898, %v886, 0.0
      %v900 = vadd.f32 %v899, 0.0
      %v901 = vld [vmem:[#allocation2] sm:$0xff]
      %v902 = vadd.f32 %v901, %v900
      %903 = vst [vmem:[#allocation2] sm:$0xff] %v902
    $region25: #{plane_geometry_forward.1} parent=1 // pred_fallthru
      _
    // Predicated region
    $region26: #{plane_geometry_forward.1} parent=1 // pred_check
      %p904 = pneg %p42
    $region27: #{plane_geometry_forward.1} parent=1 // pred_check_branch
      %906 = sbr.rel (%p904) target = $region29
    $region28: #{plane_geometry_forward.1} parent=1 // pred_region
      %v907 = vld [vmem:[#allocation2] sm:$0xff]
      %908 = vst [vmem:[%s2] sm:$0xff] %v907
    $region29: #{plane_geometry_forward.1} parent=1 // pred_fallthru
      _
    // Predicated region
    $region30: #{plane_geometry_forward.1} parent=1 // pred_check
      _
    $region31: #{plane_geometry_forward.1} parent=1 // pred_check_branch
      %910 = sbr.rel (0) target = $region33
    $region32: #{plane_geometry_forward.1} parent=1 // pred_region
      _
    $region33: #{plane_geometry_forward.1} parent=1 // pred_fallthru
      _
    // Predicated region
    $region34: #{plane_geometry_forward.1} parent=1 // pred_check
      _
    $region35: #{plane_geometry_forward.1} parent=1 // pred_check_branch
      %912 = sbr.rel (0) target = $region37
    $region36: #{plane_geometry_forward.1} parent=1 // pred_region
      _
    $region37: #{plane_geometry_forward.1} parent=1 // pred_fallthru
      _
    %913 = vsyncpa [#allocation4], 1

</llo_original>
